<compile_context>
chip_gen: v7x
topology: tpu7x:2x2x1
jax: 0.10.0
libtpu: 0.0.40
codegen_flags: <defaults>
</compile_context>

<pallas_src>
import jax
import jax.numpy as jnp
from jax.experimental import pallas as pl
from jax.experimental.pallas import tpu as pltpu

IN_FEATURES = 17 * 27     # 459
H1 = 512
H2 = 512
H3 = 128
OUT_FEATURES = 6
OUT_PAD = 8               # small lane pad; block last dim == full array dim
LEAKY_SLOPE = 0.01        # PyTorch nn.LeakyReLU default negative_slope

MAX_BATCH_TILE = 1024     # amortizes ~0.35us/step grid overhead on v6e/v7x


def _leaky_relu(x):
    return jnp.where(x > 0, x, LEAKY_SLOPE * x)


def _round_up(x, m):
    return ((x + m - 1) // m) * m


def mlp_kernel(x_ref,
               w1_ref, b1_ref,
               w2_ref, b2_ref,
               w3_ref, b3_ref,
               w4_ref, b4_ref,
               o_ref):
    # x_ref: (tb, 459) f32; weights bf16; biases f32; o_ref: (tb, OUT_PAD) f32.
    # bf16 cast happens here on the VMEM tile (cheap VPU work, no extra HBM pass).
    x = x_ref[...].astype(jnp.bfloat16)

    h = jnp.dot(x, w1_ref[...], preferred_element_type=jnp.float32) + b1_ref[...]
    h = _leaky_relu(h).astype(jnp.bfloat16)

    h = jnp.dot(h, w2_ref[...], preferred_element_type=jnp.float32) + b2_ref[...]
    h = _leaky_relu(h).astype(jnp.bfloat16)

    h = jnp.dot(h, w3_ref[...], preferred_element_type=jnp.float32) + b3_ref[...]
    h = _leaky_relu(h).astype(jnp.bfloat16)

    out = jnp.dot(h, w4_ref[...], preferred_element_type=jnp.float32) + b4_ref[...]
    o_ref[...] = out.astype(o_ref.dtype)


def _choose_batch_tile(batch):
    """Balanced batch tiles; >=2 grid steps for mid/large batches (v7x megacore)."""
    if batch <= 32:
        num_tiles = 1
    else:
        num_tiles = max(2, -(-batch // MAX_BATCH_TILE))
    return _round_up(-(-batch // num_tiles), 8)


def prepare_params(params):
    """One-time host-side prep: cast weights to bf16, pad only w4/b4 lanes 6->8."""
    w1 = params["w1"].astype(jnp.bfloat16)                        # (459, 512)
    w2 = params["w2"].astype(jnp.bfloat16)                        # (512, 512)
    w3 = params["w3"].astype(jnp.bfloat16)                        # (512, 128)
    w4 = jnp.zeros((H3, OUT_PAD), jnp.bfloat16).at[:, :OUT_FEATURES].set(
        params["w4"].astype(jnp.bfloat16))                        # (128, 8)
    b1 = params["b1"].astype(jnp.float32)
    b2 = params["b2"].astype(jnp.float32)
    b3 = params["b3"].astype(jnp.float32)
    b4 = jnp.zeros((1, OUT_PAD), jnp.float32).at[:, :OUT_FEATURES].set(
        params["b4"].astype(jnp.float32))
    return {"w1": w1, "b1": b1, "w2": w2, "b2": b2,
            "w3": w3, "b3": b3, "w4": w4, "b4": b4}


@jax.jit
def neural_network_v2_forward(x, pp):
    """x: (batch, 459) float32. pp: prepare_params output. Returns (batch, 6) f32."""
    batch = x.shape[0]
    tb = _choose_batch_tile(batch)
    num_tiles = pl.cdiv(batch, tb)

    # Weights / biases: constant index_map -> VMEM-resident across grid steps.
    const = lambda i: (0, 0)
    in_specs = [
        pl.BlockSpec((tb, IN_FEATURES), lambda i: (i, 0)),   # x tile (f32, unpadded)
        pl.BlockSpec((IN_FEATURES, H1), const),              # w1
        pl.BlockSpec((1, H1), const),                        # b1
        pl.BlockSpec((H1, H2), const),                       # w2
        pl.BlockSpec((1, H2), const),                        # b2
        pl.BlockSpec((H2, H3), const),                       # w3
        pl.BlockSpec((1, H3), const),                        # b3
        pl.BlockSpec((H3, OUT_PAD), const),                  # w4 (lane-padded 6->8)
        pl.BlockSpec((1, OUT_PAD), const),                   # b4
    ]
    out_specs = pl.BlockSpec((tb, OUT_PAD), lambda i: (i, 0))

    weight_bytes = 2 * (IN_FEATURES * H1 + H1 * H2 + H2 * H3 + H3 * OUT_PAD)
    bias_bytes = 4 * (H1 + H2 + H3 + OUT_PAD)
    io_bytes = batch * (IN_FEATURES * 4 + OUT_PAD * 4)
    flops = 2 * num_tiles * tb * (IN_FEATURES * H1 + H1 * H2 + H2 * H3 + H3 * OUT_PAD)
    cost = pl.CostEstimate(flops=flops, transcendentals=0,
                           bytes_accessed=weight_bytes + bias_bytes + io_bytes)

    out_pad = pl.pallas_call(
        mlp_kernel,
        out_shape=jax.ShapeDtypeStruct((batch, OUT_PAD), jnp.float32),
        grid=(num_tiles,),
        in_specs=in_specs,
        out_specs=out_specs,
        compiler_params=pltpu.CompilerParams(
            dimension_semantics=("parallel",),      # v7x: shard batch over 2 TCs
            vmem_limit_bytes=32 * 1024 * 1024,      # ample even at tb=1024
        ),
        cost_estimate=cost,
    )(x,
      pp["w1"], pp["b1"],
      pp["w2"], pp["b2"],
      pp["w3"], pp["b3"],
      pp["w4"], pp["b4"])

    return out_pad[:, :OUT_FEATURES]


def init_params(key):
    """Deterministic init mirroring PyTorch Linear (stored as (in, out))."""
    def layer(k, fan_in, fan_out):
        kw, kb = jax.random.split(k)
        bound = 1.0 / jnp.sqrt(fan_in)
        w = jax.random.uniform(kw, (fan_in, fan_out), jnp.float32, -bound, bound)
        b = jax.random.uniform(kb, (1, fan_out), jnp.float32, -bound, bound)
        return w, b

    k1, k2, k3, k4 = jax.random.split(key, 4)
    w1, b1 = layer(k1, IN_FEATURES, H1)
    w2, b2 = layer(k2, H1, H2)
    w3, b3 = layer(k3, H2, H3)
    w4, b4 = layer(k4, H3, OUT_FEATURES)
    return {"w1": w1, "b1": b1, "w2": w2, "b2": b2,
            "w3": w3, "b3": b3, "w4": w4, "b4": b4}


def _reference_forward(x, pp):
    """Pure-JAX reference with the same bf16-weight / f32-accumulate semantics."""
    h = jnp.dot(x.astype(jnp.bfloat16), pp["w1"],
                preferred_element_type=jnp.float32) + pp["b1"]
    h = _leaky_relu(h).astype(jnp.bfloat16)
    h = jnp.dot(h, pp["w2"], preferred_element_type=jnp.float32) + pp["b2"]
    h = _leaky_relu(h).astype(jnp.bfloat16)
    h = jnp.dot(h, pp["w3"], preferred_element_type=jnp.float32) + pp["b3"]
    h = _leaky_relu(h).astype(jnp.bfloat16)
    out = jnp.dot(h, pp["w4"], preferred_element_type=jnp.float32) + pp["b4"]
    return out[:, :OUT_FEATURES]


if __name__ == "__main__":
    key = jax.random.PRNGKey(0)
    k_params, k_x = jax.random.split(key)

    params = init_params(k_params)
    pp = prepare_params(params)          # one-time bf16 cast + w4/b4 lane pad

    # batch=8: single exact tile. batch=40: two tiles, last one partial
    # (exercises Pallas partial-block read padding / masked writeback).
    for batch in (8, 40):
        kx = jax.random.fold_in(k_x, batch)
        x = jax.random.normal(kx, (batch, IN_FEATURES), dtype=jnp.float32)

        out = neural_network_v2_forward(x, pp)
        out = jax.block_until_ready(out)

        ref = _reference_forward(x, pp)
        assert out.shape == (batch, OUT_FEATURES)
        assert jnp.allclose(out, ref, atol=2e-2, rtol=2e-2), \
            f"mismatch vs JAX reference at batch={batch}"

    print("KERNEL_OK")
</pallas_src>

<mosaic_0001>
module attributes {stable_mosaic.version = 11 : i64} {
  func.func @mlp_kernel(%arg0: i32, %arg1: memref<8x459xf32, #tpu.memory_space<vmem>>, %arg2: memref<459x512xbf16, #tpu.memory_space<vmem>>, %arg3: memref<1x512xf32, #tpu.memory_space<vmem>>, %arg4: memref<512x512xbf16, #tpu.memory_space<vmem>>, %arg5: memref<1x512xf32, #tpu.memory_space<vmem>>, %arg6: memref<512x128xbf16, #tpu.memory_space<vmem>>, %arg7: memref<1x128xf32, #tpu.memory_space<vmem>>, %arg8: memref<128x8xbf16, #tpu.memory_space<vmem>>, %arg9: memref<1x8xf32, #tpu.memory_space<vmem>>, %arg10: memref<8x8xf32, #tpu.memory_space<vmem>>) attributes {dimension_semantics = [#tpu.dimension_semantics<parallel>], iteration_bounds = array<i64: 1>, scalar_prefetch = 0 : i64, scratch_operands = 0 : i64, tpu.core_type = #tpu.core_type<tc>, window_params = [{transform_indices = @transform_0, window_bounds = array<i64: 8, 459>}, {pipeline_mode = #tpu.pipeline_mode<synchronous>, transform_indices = @transform_1, window_bounds = array<i64: 459, 512>}, {pipeline_mode = #tpu.pipeline_mode<synchronous>, transform_indices = @transform_2, window_bounds = array<i64: 1, 512>}, {pipeline_mode = #tpu.pipeline_mode<synchronous>, transform_indices = @transform_3, window_bounds = array<i64: 512, 512>}, {pipeline_mode = #tpu.pipeline_mode<synchronous>, transform_indices = @transform_4, window_bounds = array<i64: 1, 512>}, {pipeline_mode = #tpu.pipeline_mode<synchronous>, transform_indices = @transform_5, window_bounds = array<i64: 512, 128>}, {pipeline_mode = #tpu.pipeline_mode<synchronous>, transform_indices = @transform_6, window_bounds = array<i64: 1, 128>}, {pipeline_mode = #tpu.pipeline_mode<synchronous>, transform_indices = @transform_7, window_bounds = array<i64: 128, 8>}, {pipeline_mode = #tpu.pipeline_mode<synchronous>, transform_indices = @transform_8, window_bounds = array<i64: 1, 8>}, {transform_indices = @transform_9, window_bounds = array<i64: 8, 8>}]} {
    %c0 = arith.constant 0 : index
    %c0_0 = arith.constant 0 : index
    %0 = vector.load %arg1[%c0, %c0_0] : memref<8x459xf32, #tpu.memory_space<vmem>>, vector<8x459xf32>
    %1 = arith.truncf %0 : vector<8x459xf32> to vector<8x459xbf16>
    %c0_1 = arith.constant 0 : index
    %c0_2 = arith.constant 0 : index
    %2 = vector.load %arg2[%c0_1, %c0_2] : memref<459x512xbf16, #tpu.memory_space<vmem>>, vector<459x512xbf16>
    %cst = arith.constant dense<0.000000e+00> : vector<8x512xf32>
    %3 = tpu.matmul %1, %2, %cst {dimension_numbers = #tpu.dot_dimension_numbers<[1], [0], [0], [1], [0, 0, 1, 1], [], []>} : vector<8x459xbf16>, vector<459x512xbf16>, vector<8x512xf32> -> vector<8x512xf32>
    %c0_3 = arith.constant 0 : index
    %c0_4 = arith.constant 0 : index
    %4 = vector.load %arg3[%c0_3, %c0_4] : memref<1x512xf32, #tpu.memory_space<vmem>>, vector<1x512xf32>
    %5 = vector.broadcast %4 : vector<1x512xf32> to vector<8x512xf32>
    %6 = arith.addf %3, %5 : vector<8x512xf32>
    %cst_5 = arith.constant 0.000000e+00 : f32
    %7 = vector.broadcast %cst_5 : f32 to vector<8x512xf32>
    %8 = arith.cmpf ogt, %6, %7 : vector<8x512xf32>
    %cst_6 = arith.constant 0.00999999977 : f32
    %9 = vector.broadcast %cst_6 : f32 to vector<8x512xf32>
    %10 = arith.mulf %9, %6 : vector<8x512xf32>
    %11 = arith.select %8, %6, %10 : vector<8x512xi1>, vector<8x512xf32>
    %12 = arith.truncf %11 : vector<8x512xf32> to vector<8x512xbf16>
    %c0_7 = arith.constant 0 : index
    %c0_8 = arith.constant 0 : index
    %13 = vector.load %arg4[%c0_7, %c0_8] : memref<512x512xbf16, #tpu.memory_space<vmem>>, vector<512x512xbf16>
    %cst_9 = arith.constant dense<0.000000e+00> : vector<8x512xf32>
    %14 = tpu.matmul %12, %13, %cst_9 {dimension_numbers = #tpu.dot_dimension_numbers<[1], [0], [0], [1], [0, 0, 1, 1], [], []>} : vector<8x512xbf16>, vector<512x512xbf16>, vector<8x512xf32> -> vector<8x512xf32>
    %c0_10 = arith.constant 0 : index
    %c0_11 = arith.constant 0 : index
    %15 = vector.load %arg5[%c0_10, %c0_11] : memref<1x512xf32, #tpu.memory_space<vmem>>, vector<1x512xf32>
    %16 = vector.broadcast %15 : vector<1x512xf32> to vector<8x512xf32>
    %17 = arith.addf %14, %16 : vector<8x512xf32>
    %cst_12 = arith.constant 0.000000e+00 : f32
    %18 = vector.broadcast %cst_12 : f32 to vector<8x512xf32>
    %19 = arith.cmpf ogt, %17, %18 : vector<8x512xf32>
    %cst_13 = arith.constant 0.00999999977 : f32
    %20 = vector.broadcast %cst_13 : f32 to vector<8x512xf32>
    %21 = arith.mulf %20, %17 : vector<8x512xf32>
    %22 = arith.select %19, %17, %21 : vector<8x512xi1>, vector<8x512xf32>
    %23 = arith.truncf %22 : vector<8x512xf32> to vector<8x512xbf16>
    %c0_14 = arith.constant 0 : index
    %c0_15 = arith.constant 0 : index
    %24 = vector.load %arg6[%c0_14, %c0_15] : memref<512x128xbf16, #tpu.memory_space<vmem>>, vector<512x128xbf16>
    %cst_16 = arith.constant dense<0.000000e+00> : vector<8x128xf32>
    %25 = tpu.matmul %23, %24, %cst_16 {dimension_numbers = #tpu.dot_dimension_numbers<[1], [0], [0], [1], [0, 0, 1, 1], [], []>} : vector<8x512xbf16>, vector<512x128xbf16>, vector<8x128xf32> -> vector<8x128xf32>
    %c0_17 = arith.constant 0 : index
    %c0_18 = arith.constant 0 : index
    %26 = vector.load %arg7[%c0_17, %c0_18] : memref<1x128xf32, #tpu.memory_space<vmem>>, vector<1x128xf32>
    %27 = vector.broadcast %26 : vector<1x128xf32> to vector<8x128xf32>
    %28 = arith.addf %25, %27 : vector<8x128xf32>
    %cst_19 = arith.constant 0.000000e+00 : f32
    %29 = vector.broadcast %cst_19 : f32 to vector<8x128xf32>
    %30 = arith.cmpf ogt, %28, %29 : vector<8x128xf32>
    %cst_20 = arith.constant 0.00999999977 : f32
    %31 = vector.broadcast %cst_20 : f32 to vector<8x128xf32>
    %32 = arith.mulf %31, %28 : vector<8x128xf32>
    %33 = arith.select %30, %28, %32 : vector<8x128xi1>, vector<8x128xf32>
    %34 = arith.truncf %33 : vector<8x128xf32> to vector<8x128xbf16>
    %c0_21 = arith.constant 0 : index
    %c0_22 = arith.constant 0 : index
    %35 = vector.load %arg8[%c0_21, %c0_22] : memref<128x8xbf16, #tpu.memory_space<vmem>>, vector<128x8xbf16>
    %cst_23 = arith.constant dense<0.000000e+00> : vector<8x8xf32>
    %36 = tpu.matmul %34, %35, %cst_23 {dimension_numbers = #tpu.dot_dimension_numbers<[1], [0], [0], [1], [0, 0, 1, 1], [], []>} : vector<8x128xbf16>, vector<128x8xbf16>, vector<8x8xf32> -> vector<8x8xf32>
    %c0_24 = arith.constant 0 : index
    %c0_25 = arith.constant 0 : index
    %37 = vector.load %arg9[%c0_24, %c0_25] : memref<1x8xf32, #tpu.memory_space<vmem>>, vector<1x8xf32>
    %38 = vector.broadcast %37 : vector<1x8xf32> to vector<8x8xf32>
    %39 = arith.addf %36, %38 : vector<8x8xf32>
    %c0_26 = arith.constant 0 : index
    %c0_27 = arith.constant 0 : index
    %40 = vector.load %arg10[%c0_26, %c0_27] : memref<8x8xf32, #tpu.memory_space<vmem>>, vector<8x8xf32>
    tpu.vector_store %arg10[%c0_26, %c0_27], %39 {strides = array<i32>} : memref<8x8xf32, #tpu.memory_space<vmem>>, vector<8x8xf32>,
    return
  }
  func.func @transform_0(%arg0: i32) -> (i32, i32) {
    %c0_i32 = arith.constant 0 : i32
    %c0_i32_0 = arith.constant 0 : i32
    return %arg0, %c0_i32 : i32, i32
  }
  func.func @transform_1(%arg0: i32) -> (i32, i32) {
    %c0_i32 = arith.constant 0 : i32
    %c0_i32_0 = arith.constant 0 : i32
    %c0_i32_1 = arith.constant 0 : i32
    return %c0_i32, %c0_i32_0 : i32, i32
  }
  func.func @transform_2(%arg0: i32) -> (i32, i32) {
    %c0_i32 = arith.constant 0 : i32
    %c0_i32_0 = arith.constant 0 : i32
    %c0_i32_1 = arith.constant 0 : i32
    return %c0_i32, %c0_i32_0 : i32, i32
  }
  func.func @transform_3(%arg0: i32) -> (i32, i32) {
    %c0_i32 = arith.constant 0 : i32
    %c0_i32_0 = arith.constant 0 : i32
    %c0_i32_1 = arith.constant 0 : i32
    return %c0_i32, %c0_i32_0 : i32, i32
  }
  func.func @transform_4(%arg0: i32) -> (i32, i32) {
    %c0_i32 = arith.constant 0 : i32
    %c0_i32_0 = arith.constant 0 : i32
    %c0_i32_1 = arith.constant 0 : i32
    return %c0_i32, %c0_i32_0 : i32, i32
  }
  func.func @transform_5(%arg0: i32) -> (i32, i32) {
    %c0_i32 = arith.constant 0 : i32
    %c0_i32_0 = arith.constant 0 : i32
    %c0_i32_1 = arith.constant 0 : i32
    return %c0_i32, %c0_i32_0 : i32, i32
  }
  func.func @transform_6(%arg0: i32) -> (i32, i32) {
    %c0_i32 = arith.constant 0 : i32
    %c0_i32_0 = arith.constant 0 : i32
    %c0_i32_1 = arith.constant 0 : i32
    return %c0_i32, %c0_i32_0 : i32, i32
  }
  func.func @transform_7(%arg0: i32) -> (i32, i32) {
    %c0_i32 = arith.constant 0 : i32
    %c0_i32_0 = arith.constant 0 : i32
    %c0_i32_1 = arith.constant 0 : i32
    return %c0_i32, %c0_i32_0 : i32, i32
  }
  func.func @transform_8(%arg0: i32) -> (i32, i32) {
    %c0_i32 = arith.constant 0 : i32
    %c0_i32_0 = arith.constant 0 : i32
    %c0_i32_1 = arith.constant 0 : i32
    return %c0_i32, %c0_i32_0 : i32, i32
  }
  func.func @transform_9(%arg0: i32) -> (i32, i32) {
    %c0_i32 = arith.constant 0 : i32
    %c0_i32_0 = arith.constant 0 : i32
    return %arg0, %c0_i32 : i32, i32
  }
}

</mosaic_0001>

<llo_original>
// kernel: neural_network_v2_forward.1
$region0: #{neural_network_v2_forward.1}
  #allocation0 [shape = 'u32[]', space=smem, size = 0x4, offset = 0x4, fixed_abs, tag = 'smem constant byte address 0x4 - core index']
  #allocation1 [shape = 'u32[144,128]{1,0:T(1,128)}', space=vmem, size = 0x12000, scoped, tag = 'internal scratch']
  %s0 = inlined_call_operand.vmem [shape: f32[8,459], index: 0, kind: input, shape index: {}]
  %s1 = inlined_call_operand.hbm [shape: bf16[459,512], index: 1, kind: input, shape index: {}]
  %s2 = inlined_call_operand.vmem [shape: f32[1,512], index: 2, kind: input, shape index: {}]
  %s3 = inlined_call_operand.hbm [shape: bf16[512,512], index: 3, kind: input, shape index: {}]
  %s4 = inlined_call_operand.vmem [shape: f32[1,512], index: 4, kind: input, shape index: {}]
  %s5 = inlined_call_operand.hbm [shape: bf16[512,128], index: 5, kind: input, shape index: {}]
  %s6 = inlined_call_operand.vmem [shape: f32[1,128], index: 6, kind: input, shape index: {}]
  %s7 = inlined_call_operand.vmem [shape: bf16[128,8], index: 7, kind: input, shape index: {}]
  %s8 = inlined_call_operand.vmem [shape: f32[1,8], index: 8, kind: input, shape index: {}]
  %s9 = inlined_call_operand.hbm [shape: f32[8,8], index: 9, kind: output, shape index: {}]
  %s10 = sld [smem:[#allocation0]]
  $region58: #{neural_network_v2_forward.1} parent=0
    _
  %s12 = ssub.s32 1, %s10
  %s13 = scalar_select 0, %s12, %s10
  $region1: #{neural_network_v2_forward.1} parent=0
    #allocation2 [shape = 'u8[475136]{0}', space=vmem, size = 0x74000, scoped, tag = 'input window, operand 1, single buffered']
    #allocation3 [shape = 's32[1]{0}', space=sflag, size = 0x4, scoped, tag = 'scoped memory for neural_network_v2_forward.1']
    #allocation4 [shape = 's32[1]{0}', space=sflag, size = 0x4, scoped, tag = 'scoped memory for neural_network_v2_forward.1']
    #allocation5 [shape = 'u8[524288]{0}', space=vmem, size = 0x80000, scoped, tag = 'input window, operand 3, single buffered']
    #allocation6 [shape = 's32[1]{0}', space=sflag, size = 0x4, scoped, tag = 'scoped memory for neural_network_v2_forward.1']
    #allocation7 [shape = 'u8[131072]{0}', space=vmem, size = 0x20000, scoped, tag = 'input window, operand 5, single buffered']
    #allocation8 [shape = 'u8[4096]{0}', space=vmem, size = 0x1000, scoped, tag = 'output window, operand 0, single buffered']
    %14 = vsyncpa [#allocation3], 0
    %15 = vsyncpa [#allocation6], 0
    %16 = vsyncpa [#allocation4], 0
    // Predicated region
    $region2: #{neural_network_v2_forward.1} parent=1 // pred_check
      _
    $region3: #{neural_network_v2_forward.1} parent=1 // pred_check_branch
      %18 = sbr.rel (0) target = $region5
    $region4: #{neural_network_v2_forward.1} parent=1 // pred_region
      _
    $region5: #{neural_network_v2_forward.1} parent=1 // pred_fallthru
      _
    // Predicated region
    $region6: #{neural_network_v2_forward.1} parent=1 // pred_check
      _
    $region7: #{neural_network_v2_forward.1} parent=1 // pred_check_branch
      %20 = sbr.rel (0) target = $region9
    $region8: #{neural_network_v2_forward.1} parent=1 // pred_region
      %s22 = ssub.s32 14848, 14848
      %23 = vsyncadd [#allocation3], %s22
      %s24 = sshll.u32 [#allocation2], 4
      %s25 = int_to_ptr.vmem [resolvable:$true] %s24
      %30 = dma.hbm_to_vmem [thread:$0]  %s1, 14848, %s25, [#allocation3], 256, 256, 16
    $region9: #{neural_network_v2_forward.1} parent=1 // pred_fallthru
      _
    // Predicated region
    $region10: #{neural_network_v2_forward.1} parent=1 // pred_check
      _
    $region11: #{neural_network_v2_forward.1} parent=1 // pred_check_branch
      %32 = sbr.rel (0) target = $region13
    $region12: #{neural_network_v2_forward.1} parent=1 // pred_region
      _
    $region13: #{neural_network_v2_forward.1} parent=1 // pred_fallthru
      _
    // Predicated region
    $region14: #{neural_network_v2_forward.1} parent=1 // pred_check
      _
    $region15: #{neural_network_v2_forward.1} parent=1 // pred_check_branch
      %34 = sbr.rel (0) target = $region17
    $region16: #{neural_network_v2_forward.1} parent=1 // pred_region
      %s36 = ssub.s32 16384, 16384
      %37 = vsyncadd [#allocation6], %s36
      %s38 = sshll.u32 [#allocation5], 4
      %s39 = int_to_ptr.vmem [resolvable:$true] %s38
      %44 = dma.hbm_to_vmem [thread:$0]  %s3, 16384, %s39, [#allocation6], 256, 256, 16
    $region17: #{neural_network_v2_forward.1} parent=1 // pred_fallthru
      _
    // Predicated region
    $region18: #{neural_network_v2_forward.1} parent=1 // pred_check
      _
    $region19: #{neural_network_v2_forward.1} parent=1 // pred_check_branch
      %46 = sbr.rel (0) target = $region21
    $region20: #{neural_network_v2_forward.1} parent=1 // pred_region
      _
    $region21: #{neural_network_v2_forward.1} parent=1 // pred_fallthru
      _
    // Predicated region
    $region22: #{neural_network_v2_forward.1} parent=1 // pred_check
      _
    $region23: #{neural_network_v2_forward.1} parent=1 // pred_check_branch
      %48 = sbr.rel (0) target = $region25
    $region24: #{neural_network_v2_forward.1} parent=1 // pred_region
      %s50 = ssub.s32 4096, 4096
      %51 = vsyncadd [#allocation6], %s50
      %s52 = sshll.u32 [#allocation7], 4
      %s53 = int_to_ptr.vmem [resolvable:$true] %s52
      %58 = dma.hbm_to_vmem [thread:$0]  %s5, 4096, %s53, [#allocation6], 64, 64, 4
    $region25: #{neural_network_v2_forward.1} parent=1 // pred_fallthru
      _
    // Predicated region
    $region26: #{neural_network_v2_forward.1} parent=1 // pred_check
      _
    $region27: #{neural_network_v2_forward.1} parent=1 // pred_check_branch
      %60 = sbr.rel (0) target = $region29
    $region28: #{neural_network_v2_forward.1} parent=1 // pred_region
      _
    $region29: #{neural_network_v2_forward.1} parent=1 // pred_fallthru
      _
    // Predicated region
    $region30: #{neural_network_v2_forward.1} parent=1 // pred_check
      _
    $region31: #{neural_network_v2_forward.1} parent=1 // pred_check_branch
      %62 = sbr.rel (0) target = $region33
    $region32: #{neural_network_v2_forward.1} parent=1 // pred_region
      _
    $region33: #{neural_network_v2_forward.1} parent=1 // pred_fallthru
      _
    // Predicated region
    $region34: #{neural_network_v2_forward.1} parent=1 // pred_check
      _
    $region35: #{neural_network_v2_forward.1} parent=1 // pred_check_branch
      %64 = sbr.rel (0) target = $region37
    $region36: #{neural_network_v2_forward.1} parent=1 // pred_region
      _
    $region37: #{neural_network_v2_forward.1} parent=1 // pred_fallthru
      _
    // Predicated region
    $region38: #{neural_network_v2_forward.1} parent=1 // pred_check
      _
    $region39: #{neural_network_v2_forward.1} parent=1 // pred_check_branch
      %66 = sbr.rel (0) target = $region41
    $region40: #{neural_network_v2_forward.1} parent=1 // pred_region
      %67 = dma.done [#allocation3], 14848
    $region41: #{neural_network_v2_forward.1} parent=1 // pred_fallthru
      _
    // Predicated region
    $region42: #{neural_network_v2_forward.1} parent=1 // pred_check
      _
    $region43: #{neural_network_v2_forward.1} parent=1 // pred_check_branch
      %69 = sbr.rel (0) target = $region45
    $region44: #{neural_network_v2_forward.1} parent=1 // pred_region
      %70 = dma.done [#allocation6], 16384
    $region45: #{neural_network_v2_forward.1} parent=1 // pred_fallthru
      _
    // Predicated region
    $region46: #{neural_network_v2_forward.1} parent=1 // pred_check
      _
    $region47: #{neural_network_v2_forward.1} parent=1 // pred_check_branch
      %72 = sbr.rel (0) target = $region49
    $region48: #{neural_network_v2_forward.1} parent=1 // pred_region
      %73 = dma.done [#allocation6], 4096
    $region49: #{neural_network_v2_forward.1} parent=1 // pred_fallthru
      _
    %v75 = vld [vmem:[%s0] sm:$0xff]
    %v76 = vld [vmem:[%s0 + $0x8] sm:$0xff]
    %v77 = vld [vmem:[%s0 + $0x10] sm:$0xff]
    %v78 = vld [vmem:[%s0 + $0x18] sm:$0xff]
    %v79 = vpack.c.bf16 %v75, %v75
    %v80 = vpack.c.bf16 %v76, %v76
    %v81 = vpack.c.bf16 %v77, %v77
    %v82 = vpack.c.bf16 %v78, %v78
    %v83 = vld [vmem:[#allocation2] sm:$0xff]
    %v84 = vld [vmem:[#allocation2 + $0x8] sm:$0xff]
    %v85 = vld [vmem:[#allocation2 + $0x10] sm:$0xff]
    %v86 = vld [vmem:[#allocation2 + $0x18] sm:$0xff]
    %v87 = vld [vmem:[#allocation2 + $0x20] sm:$0xff]
    %v88 = vld [vmem:[#allocation2 + $0x28] sm:$0xff]
    %v89 = vld [vmem:[#allocation2 + $0x30] sm:$0xff]
    %v90 = vld [vmem:[#allocation2 + $0x38] sm:$0xff]
    %v91 = vld [vmem:[#allocation2 + $0x40] sm:$0xff]
    %v92 = vld [vmem:[#allocation2 + $0x48] sm:$0xff]
    %v93 = vld [vmem:[#allocation2 + $0x50] sm:$0xff]
    %v94 = vld [vmem:[#allocation2 + $0x58] sm:$0xff]
    %v95 = vld [vmem:[#allocation2 + $0x60] sm:$0xff]
    %v96 = vld [vmem:[#allocation2 + $0x68] sm:$0xff]
    %v97 = vld [vmem:[#allocation2 + $0x70] sm:$0xff]
    %v98 = vld [vmem:[#allocation2 + $0x78] sm:$0xff]
    %v99 = vld [vmem:[#allocation2 + $0x80] sm:$0xff]
    %v100 = vld [vmem:[#allocation2 + $0x88] sm:$0xff]
    %v101 = vld [vmem:[#allocation2 + $0x90] sm:$0xff]
    %v102 = vld [vmem:[#allocation2 + $0x98] sm:$0xff]
    %v103 = vld [vmem:[#allocation2 + $0xa0] sm:$0xff]
    %v104 = vld [vmem:[#allocation2 + $0xa8] sm:$0xff]
    %v105 = vld [vmem:[#allocation2 + $0xb0] sm:$0xff]
    %v106 = vld [vmem:[#allocation2 + $0xb8] sm:$0xff]
    %v107 = vld [vmem:[#allocation2 + $0xc0] sm:$0xff]
    %v108 = vld [vmem:[#allocation2 + $0xc8] sm:$0xff]
    %v109 = vld [vmem:[#allocation2 + $0xd0] sm:$0xff]
    %v110 = vld [vmem:[#allocation2 + $0xd8] sm:$0xff]
    %v111 = vld [vmem:[#allocation2 + $0xe0] sm:$0xff]
    %v112 = vld [vmem:[#allocation2 + $0xe8] sm:$0xff]
    %v113 = vld [vmem:[#allocation2 + $0xf0] sm:$0xff]
    %v114 = vld [vmem:[#allocation2 + $0xf8] sm:$0xff]
    %v115 = vld [vmem:[#allocation2 + $0x100] sm:$0xff]
    %v116 = vld [vmem:[#allocation2 + $0x108] sm:$0xff]
    %v117 = vld [vmem:[#allocation2 + $0x110] sm:$0xff]
    %v118 = vld [vmem:[#allocation2 + $0x118] sm:$0xff]
    %v119 = vld [vmem:[#allocation2 + $0x120] sm:$0xff]
    %v120 = vld [vmem:[#allocation2 + $0x128] sm:$0xff]
    %v121 = vld [vmem:[#allocation2 + $0x130] sm:$0xff]
    %v122 = vld [vmem:[#allocation2 + $0x138] sm:$0xff]
    %v123 = vld [vmem:[#allocation2 + $0x140] sm:$0xff]
    %v124 = vld [vmem:[#allocation2 + $0x148] sm:$0xff]
    %v125 = vld [vmem:[#allocation2 + $0x150] sm:$0xff]
    %v126 = vld [vmem:[#allocation2 + $0x158] sm:$0xff]
    %v127 = vld [vmem:[#allocation2 + $0x160] sm:$0xff]
    %v128 = vld [vmem:[#allocation2 + $0x168] sm:$0xff]
    %v129 = vld [vmem:[#allocation2 + $0x170] sm:$0xff]
    %v130 = vld [vmem:[#allocation2 + $0x178] sm:$0xff]
    %v131 = vld [vmem:[#allocation2 + $0x180] sm:$0xff]
    %v132 = vld [vmem:[#allocation2 + $0x188] sm:$0xff]
    %v133 = vld [vmem:[#allocation2 + $0x190] sm:$0xff]
    %v134 = vld [vmem:[#allocation2 + $0x198] sm:$0xff]
    %v135 = vld [vmem:[#allocation2 + $0x1a0] sm:$0xff]
    %v136 = vld [vmem:[#allocation2 + $0x1a8] sm:$0xff]
    %v137 = vld [vmem:[#allocation2 + $0x1b0] sm:$0xff]
    %v138 = vld [vmem:[#allocation2 + $0x1b8] sm:$0xff]
    %v139 = vld [vmem:[#allocation2 + $0x1c0] sm:$0xff]
    %v140 = vld [vmem:[#allocation2 + $0x1c8] sm:$0xff]
    %v141 = vld [vmem:[#allocation2 + $0x1d0] sm:$0xff]
    %v142 = vld [vmem:[#allocation2 + $0x1d8] sm:$0xff]
    %v143 = vld [vmem:[#allocation2 + $0x1e0] sm:$0xff]
    %v144 = vld [vmem:[#allocation2 + $0x1e8] sm:$0xff]
    %v145 = vld [vmem:[#allocation2 + $0x1f0] sm:$0xff]
    %v146 = vld [vmem:[#allocation2 + $0x1f8] sm:$0xff]
    %v147 = vld [vmem:[#allocation2 + $0x200] sm:$0xff]
    %v148 = vld [vmem:[#allocation2 + $0x208] sm:$0xff]
    %v149 = vld [vmem:[#allocation2 + $0x210] sm:$0xff]
    %v150 = vld [vmem:[#allocation2 + $0x218] sm:$0xff]
    %v151 = vld [vmem:[#allocation2 + $0x220] sm:$0xff]
    %v152 = vld [vmem:[#allocation2 + $0x228] sm:$0xff]
    %v153 = vld [vmem:[#allocation2 + $0x230] sm:$0xff]
    %v154 = vld [vmem:[#allocation2 + $0x238] sm:$0xff]
    %v155 = vld [vmem:[#allocation2 + $0x240] sm:$0xff]
    %v156 = vld [vmem:[#allocation2 + $0x248] sm:$0xff]
    %v157 = vld [vmem:[#allocation2 + $0x250] sm:$0xff]
    %v158 = vld [vmem:[#allocation2 + $0x258] sm:$0xff]
    %v159 = vld [vmem:[#allocation2 + $0x260] sm:$0xff]
    %v160 = vld [vmem:[#allocation2 + $0x268] sm:$0xff]
    %v161 = vld [vmem:[#allocation2 + $0x270] sm:$0xff]
    %v162 = vld [vmem:[#allocation2 + $0x278] sm:$0xff]
    %v163 = vld [vmem:[#allocation2 + $0x280] sm:$0xff]
    %v164 = vld [vmem:[#allocation2 + $0x288] sm:$0xff]
    %v165 = vld [vmem:[#allocation2 + $0x290] sm:$0xff]
    %v166 = vld [vmem:[#allocation2 + $0x298] sm:$0xff]
    %v167 = vld [vmem:[#allocation2 + $0x2a0] sm:$0xff]
    %v168 = vld [vmem:[#allocation2 + $0x2a8] sm:$0xff]
    %v169 = vld [vmem:[#allocation2 + $0x2b0] sm:$0xff]
    %v170 = vld [vmem:[#allocation2 + $0x2b8] sm:$0xff]
    %v171 = vld [vmem:[#allocation2 + $0x2c0] sm:$0xff]
    %v172 = vld [vmem:[#allocation2 + $0x2c8] sm:$0xff]
    %v173 = vld [vmem:[#allocation2 + $0x2d0] sm:$0xff]
    %v174 = vld [vmem:[#allocation2 + $0x2d8] sm:$0xff]
    %v175 = vld [vmem:[#allocation2 + $0x2e0] sm:$0xff]
    %v176 = vld [vmem:[#allocation2 + $0x2e8] sm:$0xff]
    %v177 = vld [vmem:[#allocation2 + $0x2f0] sm:$0xff]
    %v178 = vld [vmem:[#allocation2 + $0x2f8] sm:$0xff]
    %v179 = vld [vmem:[#allocation2 + $0x300] sm:$0xff]
    %v180 = vld [vmem:[#allocation2 + $0x308] sm:$0xff]
    %v181 = vld [vmem:[#allocation2 + $0x310] sm:$0xff]
    %v182 = vld [vmem:[#allocation2 + $0x318] sm:$0xff]
    %v183 = vld [vmem:[#allocation2 + $0x320] sm:$0xff]
    %v184 = vld [vmem:[#allocation2 + $0x328] sm:$0xff]
    %v185 = vld [vmem:[#allocation2 + $0x330] sm:$0xff]
    %v186 = vld [vmem:[#allocation2 + $0x338] sm:$0xff]
    %v187 = vld [vmem:[#allocation2 + $0x340] sm:$0xff]
    %v188 = vld [vmem:[#allocation2 + $0x348] sm:$0xff]
    %v189 = vld [vmem:[#allocation2 + $0x350] sm:$0xff]
    %v190 = vld [vmem:[#allocation2 + $0x358] sm:$0xff]
    %v191 = vld [vmem:[#allocation2 + $0x360] sm:$0xff]
    %v192 = vld [vmem:[#allocation2 + $0x368] sm:$0xff]
    %v193 = vld [vmem:[#allocation2 + $0x370] sm:$0xff]
    %v194 = vld [vmem:[#allocation2 + $0x378] sm:$0xff]
    %v195 = vld [vmem:[#allocation2 + $0x380] sm:$0xff]
    %v196 = vld [vmem:[#allocation2 + $0x388] sm:$0xff]
    %v197 = vld [vmem:[#allocation2 + $0x390] sm:$0x33]
    %v198 = vld [vmem:[#allocation2 + $0x398] sm:$0x33]
    %v199 = vld [vmem:[%s2] sm:$0xf]
    %v201 = vlaneseq
    %v202 = vshrl.u32 %v201, 7
    %v203 = vsub.s32 0, %v202
    %v204 = vrot.slane %v199, %v203
    %v205 = vlaneseq
    %v206 = vshrl.u32 %v205, 7
    %v207 = vsub.s32 1, %v206
    %v208 = vrot.slane %v199, %v207
    %v209 = vlaneseq
    %v210 = vshrl.u32 %v209, 7
    %v211 = vsub.s32 2, %v210
    %v212 = vrot.slane %v199, %v211
    %v213 = vlaneseq
    %v214 = vshrl.u32 %v213, 7
    %v215 = vsub.s32 3, %v214
    %v216 = vrot.slane %v199, %v215
    %v337 = vunpack.c.l.b16 %v83
    %v338 = vunpack.c.h.b16 %v83
    %v339 = vunpack.c.l.b16 %v84
    %v340 = vunpack.c.h.b16 %v84
    %v341 = vunpack.c.l.b16 %v85
    %v342 = vunpack.c.h.b16 %v85
    %v343 = vunpack.c.l.b16 %v86
    %v344 = vunpack.c.h.b16 %v86
    %v345 = vunpack.c.l.b16 %v87
    %v346 = vunpack.c.h.b16 %v87
    %v347 = vunpack.c.l.b16 %v88
    %v348 = vunpack.c.h.b16 %v88
    %v349 = vunpack.c.l.b16 %v89
    %v350 = vunpack.c.h.b16 %v89
    %v351 = vunpack.c.l.b16 %v90
    %v352 = vunpack.c.h.b16 %v90
    %v353 = vunpack.c.l.b16 %v91
    %v354 = vunpack.c.h.b16 %v91
    %v355 = vunpack.c.l.b16 %v92
    %v356 = vunpack.c.h.b16 %v92
    %v357 = vunpack.c.l.b16 %v93
    %v358 = vunpack.c.h.b16 %v93
    %v359 = vunpack.c.l.b16 %v94
    %v360 = vunpack.c.h.b16 %v94
    %v361 = vunpack.c.l.b16 %v95
    %v362 = vunpack.c.h.b16 %v95
    %v363 = vunpack.c.l.b16 %v96
    %v364 = vunpack.c.h.b16 %v96
    %v365 = vunpack.c.l.b16 %v97
    %v366 = vunpack.c.h.b16 %v97
    %v367 = vunpack.c.l.b16 %v98
    %v368 = vunpack.c.h.b16 %v98
    %v369 = vunpack.c.l.b16 %v99
    %v370 = vunpack.c.h.b16 %v99
    %v371 = vunpack.c.l.b16 %v100
    %v372 = vunpack.c.h.b16 %v100
    %v373 = vunpack.c.l.b16 %v101
    %v374 = vunpack.c.h.b16 %v101
    %v375 = vunpack.c.l.b16 %v102
    %v376 = vunpack.c.h.b16 %v102
    %v377 = vunpack.c.l.b16 %v103
    %v378 = vunpack.c.h.b16 %v103
    %v379 = vunpack.c.l.b16 %v104
    %v380 = vunpack.c.h.b16 %v104
    %v381 = vunpack.c.l.b16 %v105
    %v382 = vunpack.c.h.b16 %v105
    %v383 = vunpack.c.l.b16 %v106
    %v384 = vunpack.c.h.b16 %v106
    %v385 = vunpack.c.l.b16 %v107
    %v386 = vunpack.c.h.b16 %v107
    %v387 = vunpack.c.l.b16 %v108
    %v388 = vunpack.c.h.b16 %v108
    %v389 = vunpack.c.l.b16 %v109
    %v390 = vunpack.c.h.b16 %v109
    %v391 = vunpack.c.l.b16 %v110
    %v392 = vunpack.c.h.b16 %v110
    %v393 = vunpack.c.l.b16 %v111
    %v394 = vunpack.c.h.b16 %v111
    %v395 = vunpack.c.l.b16 %v112
    %v396 = vunpack.c.h.b16 %v112
    %v397 = vunpack.c.l.b16 %v113
    %v398 = vunpack.c.h.b16 %v113
    %v399 = vunpack.c.l.b16 %v114
    %v400 = vunpack.c.h.b16 %v114
    %v401 = vunpack.c.l.b16 %v115
    %v402 = vunpack.c.h.b16 %v115
    %v403 = vunpack.c.l.b16 %v116
    %v404 = vunpack.c.h.b16 %v116
    %v405 = vunpack.c.l.b16 %v117
    %v406 = vunpack.c.h.b16 %v117
    %v407 = vunpack.c.l.b16 %v118
    %v408 = vunpack.c.h.b16 %v118
    %v409 = vunpack.c.l.b16 %v119
    %v410 = vunpack.c.h.b16 %v119
    %v411 = vunpack.c.l.b16 %v120
    %v412 = vunpack.c.h.b16 %v120
    %v413 = vunpack.c.l.b16 %v121
    %v414 = vunpack.c.h.b16 %v121
    %v415 = vunpack.c.l.b16 %v122
    %v416 = vunpack.c.h.b16 %v122
    %v417 = vunpack.c.l.b16 %v123
    %v418 = vunpack.c.h.b16 %v123
    %v419 = vunpack.c.l.b16 %v124
    %v420 = vunpack.c.h.b16 %v124
    %v421 = vunpack.c.l.b16 %v125
    %v422 = vunpack.c.h.b16 %v125
    %v423 = vunpack.c.l.b16 %v126
    %v424 = vunpack.c.h.b16 %v126
    %v425 = vunpack.c.l.b16 %v127
    %v426 = vunpack.c.h.b16 %v127
    %v427 = vunpack.c.l.b16 %v128
    %v428 = vunpack.c.h.b16 %v128
    %v429 = vunpack.c.l.b16 %v129
    %v430 = vunpack.c.h.b16 %v129
    %v431 = vunpack.c.l.b16 %v130
    %v432 = vunpack.c.h.b16 %v130
    %v433 = vunpack.c.l.b16 %v131
    %v434 = vunpack.c.h.b16 %v131
    %v435 = vunpack.c.l.b16 %v132
    %v436 = vunpack.c.h.b16 %v132
    %v437 = vunpack.c.l.b16 %v133
    %v438 = vunpack.c.h.b16 %v133
    %v439 = vunpack.c.l.b16 %v134
    %v440 = vunpack.c.h.b16 %v134
    %v441 = vunpack.c.l.b16 %v135
    %v442 = vunpack.c.h.b16 %v135
    %v443 = vunpack.c.l.b16 %v136
    %v444 = vunpack.c.h.b16 %v136
    %v445 = vunpack.c.l.b16 %v137
    %v446 = vunpack.c.h.b16 %v137
    %v447 = vunpack.c.l.b16 %v138
    %v448 = vunpack.c.h.b16 %v138
    %v449 = vunpack.c.l.b16 %v139
    %v450 = vunpack.c.h.b16 %v139
    %v451 = vunpack.c.l.b16 %v140
    %v452 = vunpack.c.h.b16 %v140
    %v453 = vunpack.c.l.b16 %v141
    %v454 = vunpack.c.h.b16 %v141
    %v455 = vunpack.c.l.b16 %v142
    %v456 = vunpack.c.h.b16 %v142
    %v457 = vunpack.c.l.b16 %v143
    %v458 = vunpack.c.h.b16 %v143
    %v459 = vunpack.c.l.b16 %v144
    %v460 = vunpack.c.h.b16 %v144
    %v461 = vunpack.c.l.b16 %v145
    %v462 = vunpack.c.h.b16 %v145
    %v463 = vunpack.c.l.b16 %v146
    %v464 = vunpack.c.h.b16 %v146
    %v465 = vunpack.c.l.b16 %v147
    %v466 = vunpack.c.h.b16 %v147
    %v467 = vunpack.c.l.b16 %v148
    %v468 = vunpack.c.h.b16 %v148
    %v469 = vunpack.c.l.b16 %v149
    %v470 = vunpack.c.h.b16 %v149
    %v471 = vunpack.c.l.b16 %v150
    %v472 = vunpack.c.h.b16 %v150
    %v473 = vunpack.c.l.b16 %v151
    %v474 = vunpack.c.h.b16 %v151
    %v475 = vunpack.c.l.b16 %v152
    %v476 = vunpack.c.h.b16 %v152
    %v477 = vunpack.c.l.b16 %v153
    %v478 = vunpack.c.h.b16 %v153
    %v479 = vunpack.c.l.b16 %v154
    %v480 = vunpack.c.h.b16 %v154
    %v481 = vunpack.c.l.b16 %v155
    %v482 = vunpack.c.h.b16 %v155
    %v483 = vunpack.c.l.b16 %v156
    %v484 = vunpack.c.h.b16 %v156
    %v485 = vunpack.c.l.b16 %v157
    %v486 = vunpack.c.h.b16 %v157
    %v487 = vunpack.c.l.b16 %v158
    %v488 = vunpack.c.h.b16 %v158
    %v489 = vunpack.c.l.b16 %v159
    %v490 = vunpack.c.h.b16 %v159
    %v491 = vunpack.c.l.b16 %v160
    %v492 = vunpack.c.h.b16 %v160
    %v493 = vunpack.c.l.b16 %v161
    %v494 = vunpack.c.h.b16 %v161
    %v495 = vunpack.c.l.b16 %v162
    %v496 = vunpack.c.h.b16 %v162
    %v497 = vunpack.c.l.b16 %v163
    %v498 = vunpack.c.h.b16 %v163
    %v499 = vunpack.c.l.b16 %v164
    %v500 = vunpack.c.h.b16 %v164
    %v501 = vunpack.c.l.b16 %v165
    %v502 = vunpack.c.h.b16 %v165
    %v503 = vunpack.c.l.b16 %v166
    %v504 = vunpack.c.h.b16 %v166
    %v505 = vunpack.c.l.b16 %v167
    %v506 = vunpack.c.h.b16 %v167
    %v507 = vunpack.c.l.b16 %v168
    %v508 = vunpack.c.h.b16 %v168
    %v509 = vunpack.c.l.b16 %v169
    %v510 = vunpack.c.h.b16 %v169
    %v511 = vunpack.c.l.b16 %v170
    %v512 = vunpack.c.h.b16 %v170
    %v513 = vunpack.c.l.b16 %v171
    %v514 = vunpack.c.h.b16 %v171
    %v515 = vunpack.c.l.b16 %v172
    %v516 = vunpack.c.h.b16 %v172
    %v517 = vunpack.c.l.b16 %v173
    %v518 = vunpack.c.h.b16 %v173
    %v519 = vunpack.c.l.b16 %v174
    %v520 = vunpack.c.h.b16 %v174
    %v521 = vunpack.c.l.b16 %v175
    %v522 = vunpack.c.h.b16 %v175
    %v523 = vunpack.c.l.b16 %v176
    %v524 = vunpack.c.h.b16 %v176
    %v525 = vunpack.c.l.b16 %v177
    %v526 = vunpack.c.h.b16 %v177
    %v527 = vunpack.c.l.b16 %v178
    %v528 = vunpack.c.h.b16 %v178
    %v529 = vunpack.c.l.b16 %v179
    %v530 = vunpack.c.h.b16 %v179
    %v531 = vunpack.c.l.b16 %v180
    %v532 = vunpack.c.h.b16 %v180
    %v533 = vunpack.c.l.b16 %v181
    %v534 = vunpack.c.h.b16 %v181
    %v535 = vunpack.c.l.b16 %v182
    %v536 = vunpack.c.h.b16 %v182
    %v537 = vunpack.c.l.b16 %v183
    %v538 = vunpack.c.h.b16 %v183
    %v539 = vunpack.c.l.b16 %v184
    %v540 = vunpack.c.h.b16 %v184
    %v541 = vunpack.c.l.b16 %v185
    %v542 = vunpack.c.h.b16 %v185
    %v543 = vunpack.c.l.b16 %v186
    %v544 = vunpack.c.h.b16 %v186
    %v545 = vunpack.c.l.b16 %v187
    %v546 = vunpack.c.h.b16 %v187
    %v547 = vunpack.c.l.b16 %v188
    %v548 = vunpack.c.h.b16 %v188
    %v549 = vunpack.c.l.b16 %v189
    %v550 = vunpack.c.h.b16 %v189
    %v551 = vunpack.c.l.b16 %v190
    %v552 = vunpack.c.h.b16 %v190
    %v553 = vunpack.c.l.b16 %v191
    %v554 = vunpack.c.h.b16 %v191
    %v555 = vunpack.c.l.b16 %v192
    %v556 = vunpack.c.h.b16 %v192
    %v557 = vunpack.c.l.b16 %v193
    %v558 = vunpack.c.h.b16 %v193
    %v559 = vunpack.c.l.b16 %v194
    %v560 = vunpack.c.h.b16 %v194
    %v561 = vunpack.c.l.b16 %v195
    %v562 = vunpack.c.h.b16 %v195
    %v563 = vunpack.c.l.b16 %v196
    %v564 = vunpack.c.h.b16 %v196
    %v565 = vunpack.c.l.b16 %v197
    %v566 = vunpack.c.h.b16 %v197
    %v567 = vunpack.c.l.b16 %v198
    %v568 = vunpack.c.h.b16 %v198
    %v569 = vpack.c.b16 %v341, %v337
    %v570 = vpack.c.b16 %v342, %v338
    %v571 = vpack.c.b16 %v343, %v339
    %v572 = vpack.c.b16 %v344, %v340
    %v573 = vpack.c.b16 %v349, %v345
    %v574 = vpack.c.b16 %v350, %v346
    %v575 = vpack.c.b16 %v351, %v347
    %v576 = vpack.c.b16 %v352, %v348
    %v577 = vpack.c.b16 %v357, %v353
    %v578 = vpack.c.b16 %v358, %v354
    %v579 = vpack.c.b16 %v359, %v355
    %v580 = vpack.c.b16 %v360, %v356
    %v581 = vpack.c.b16 %v365, %v361
    %v582 = vpack.c.b16 %v366, %v362
    %v583 = vpack.c.b16 %v367, %v363
    %v584 = vpack.c.b16 %v368, %v364
    %v585 = vpack.c.b16 %v373, %v369
    %v586 = vpack.c.b16 %v374, %v370
    %v587 = vpack.c.b16 %v375, %v371
    %v588 = vpack.c.b16 %v376, %v372
    %v589 = vpack.c.b16 %v381, %v377
    %v590 = vpack.c.b16 %v382, %v378
    %v591 = vpack.c.b16 %v383, %v379
    %v592 = vpack.c.b16 %v384, %v380
    %v593 = vpack.c.b16 %v389, %v385
    %v594 = vpack.c.b16 %v390, %v386
    %v595 = vpack.c.b16 %v391, %v387
    %v596 = vpack.c.b16 %v392, %v388
    %v597 = vpack.c.b16 %v397, %v393
    %v598 = vpack.c.b16 %v398, %v394
    %v599 = vpack.c.b16 %v399, %v395
    %v600 = vpack.c.b16 %v400, %v396
    %v601 = vpack.c.b16 %v405, %v401
    %v602 = vpack.c.b16 %v406, %v402
    %v603 = vpack.c.b16 %v407, %v403
    %v604 = vpack.c.b16 %v408, %v404
    %v605 = vpack.c.b16 %v413, %v409
    %v606 = vpack.c.b16 %v414, %v410
    %v607 = vpack.c.b16 %v415, %v411
    %v608 = vpack.c.b16 %v416, %v412
    %v609 = vpack.c.b16 %v421, %v417
    %v610 = vpack.c.b16 %v422, %v418
    %v611 = vpack.c.b16 %v423, %v419
    %v612 = vpack.c.b16 %v424, %v420
    %v613 = vpack.c.b16 %v429, %v425
    %v614 = vpack.c.b16 %v430, %v426
    %v615 = vpack.c.b16 %v431, %v427
    %v616 = vpack.c.b16 %v432, %v428
    %v617 = vpack.c.b16 %v437, %v433
    %v618 = vpack.c.b16 %v438, %v434
    %v619 = vpack.c.b16 %v439, %v435
    %v620 = vpack.c.b16 %v440, %v436
    %v621 = vpack.c.b16 %v445, %v441
    %v622 = vpack.c.b16 %v446, %v442
    %v623 = vpack.c.b16 %v447, %v443
    %v624 = vpack.c.b16 %v448, %v444
    %v625 = vpack.c.b16 %v453, %v449
    %v626 = vpack.c.b16 %v454, %v450
    %v627 = vpack.c.b16 %v455, %v451
    %v628 = vpack.c.b16 %v456, %v452
    %v629 = vpack.c.b16 %v461, %v457
    %v630 = vpack.c.b16 %v462, %v458
    %v631 = vpack.c.b16 %v463, %v459
    %v632 = vpack.c.b16 %v464, %v460
    %v633 = vpack.c.b16 %v469, %v465
    %v634 = vpack.c.b16 %v470, %v466
    %v635 = vpack.c.b16 %v471, %v467
    %v636 = vpack.c.b16 %v472, %v468
    %v637 = vpack.c.b16 %v477, %v473
    %v638 = vpack.c.b16 %v478, %v474
    %v639 = vpack.c.b16 %v479, %v475
    %v640 = vpack.c.b16 %v480, %v476
    %v641 = vpack.c.b16 %v485, %v481
    %v642 = vpack.c.b16 %v486, %v482
    %v643 = vpack.c.b16 %v487, %v483
    %v644 = vpack.c.b16 %v488, %v484
    %v645 = vpack.c.b16 %v493, %v489
    %v646 = vpack.c.b16 %v494, %v490
    %v647 = vpack.c.b16 %v495, %v491
    %v648 = vpack.c.b16 %v496, %v492
    %v649 = vpack.c.b16 %v501, %v497
    %v650 = vpack.c.b16 %v502, %v498
    %v651 = vpack.c.b16 %v503, %v499
    %v652 = vpack.c.b16 %v504, %v500
    %v653 = vpack.c.b16 %v509, %v505
    %v654 = vpack.c.b16 %v510, %v506
    %v655 = vpack.c.b16 %v511, %v507
    %v656 = vpack.c.b16 %v512, %v508
    %v657 = vpack.c.b16 %v517, %v513
    %v658 = vpack.c.b16 %v518, %v514
    %v659 = vpack.c.b16 %v519, %v515
    %v660 = vpack.c.b16 %v520, %v516
    %v661 = vpack.c.b16 %v525, %v521
    %v662 = vpack.c.b16 %v526, %v522
    %v663 = vpack.c.b16 %v527, %v523
    %v664 = vpack.c.b16 %v528, %v524
    %v665 = vpack.c.b16 %v533, %v529
    %v666 = vpack.c.b16 %v534, %v530
    %v667 = vpack.c.b16 %v535, %v531
    %v668 = vpack.c.b16 %v536, %v532
    %v669 = vpack.c.b16 %v541, %v537
    %v670 = vpack.c.b16 %v542, %v538
    %v671 = vpack.c.b16 %v543, %v539
    %v672 = vpack.c.b16 %v544, %v540
    %v673 = vpack.c.b16 %v549, %v545
    %v674 = vpack.c.b16 %v550, %v546
    %v675 = vpack.c.b16 %v551, %v547
    %v676 = vpack.c.b16 %v552, %v548
    %v677 = vpack.c.b16 %v557, %v553
    %v678 = vpack.c.b16 %v558, %v554
    %v679 = vpack.c.b16 %v559, %v555
    %v680 = vpack.c.b16 %v560, %v556
    %v681 = vpack.c.b16 %v565, %v561
    %v682 = vpack.c.b16 %v566, %v562
    %v683 = vpack.c.b16 %v567, %v563
    %v684 = vpack.c.b16 %v568, %v564
    %vm797 = vcmask 613376
    %v799 = vsel %vm797, %v82, 0
    %vm801 = vcmask 1044480
    %vm802 = vcmask 1045504
    %v803 = vsel %vm801, 4294967295, 65535
    %v804 = vsel %vm802, %v803, 0
    %v806 = vand.u32 %v681, %v804
    %v809 = vand.u32 %v682, %v804
    %v812 = vand.u32 %v683, %v804
    %v815 = vand.u32 %v684, %v804
    %817 = vmatprep.subr.bf16.mxu0 %v570
    %818 = vmatpush1.bf16.msra.mxu0 %v569
    %819 = vmatprep.subr.bf16.mxu0 %v574
    %820 = vmatpush1.bf16.msra.mxu0 %v573
    %821 = vmatprep.subr.bf16.mxu0 %v578
    %822 = vmatpush1.bf16.msra.mxu0 %v577
    %823 = vmatprep.subr.bf16.mxu0 %v582
    %824 = vmatpush1.bf16.msra.mxu0 %v581
    %825 = vmatprep.subr.bf16.mxu0 %v586
    %826 = vmatpush1.bf16.msra.mxu0 %v585
    %827 = vmatprep.subr.bf16.mxu0 %v590
    %828 = vmatpush1.bf16.msra.mxu0 %v589
    %829 = vmatprep.subr.bf16.mxu0 %v594
    %830 = vmatpush1.bf16.msra.mxu0 %v593
    %831 = vmatprep.subr.bf16.mxu0 %v598
    %832 = vmatpush1.bf16.msra.mxu0 %v597
    %833 = vmatprep.subr.bf16.mxu0 %v602
    %834 = vmatpush1.bf16.msra.mxu0 %v601
    %835 = vmatprep.subr.bf16.mxu0 %v606
    %836 = vmatpush1.bf16.msra.mxu0 %v605
    %837 = vmatprep.subr.bf16.mxu0 %v610
    %838 = vmatpush1.bf16.msra.mxu0 %v609
    %839 = vmatprep.subr.bf16.mxu0 %v614
    %840 = vmatpush1.bf16.msra.mxu0 %v613
    %841 = vmatprep.subr.bf16.mxu0 %v618
    %842 = vmatpush1.bf16.msra.mxu0 %v617
    %843 = vmatprep.subr.bf16.mxu0 %v622
    %844 = vmatpush1.bf16.msra.mxu0 %v621
    %845 = vmatprep.subr.bf16.mxu0 %v626
    %846 = vmatpush1.bf16.msra.mxu0 %v625
    %847 = vmatprep.subr.bf16.mxu0 %v630
    %848 = vmatpush1.bf16.msra.mxu0 %v629
    %849 = vmatprep.mubr.bf16.mxu0 %v80
    %850 = vmatmul.mubr.bf16.gmra.mrb[0].mxu0 %v79
    %v851 = vpop.f32.mrb[0].mxu0
    %v852 = vadd.f32 %v204, %v851
    %v853 = vpop.f32.mrb[0].mxu0
    %v854 = vadd.f32 %v208, %v853
    %v855 = vpop.f32.mrb[0].mxu0
    %v856 = vpop.f32.mrb[0].mxu0
    %857 = vdwg.mxu0
    %858 = vmatprep.subr.bf16.mxu0 %v634
    %859 = vmatpush1.bf16.msra.mxu0 %v633
    %860 = vmatprep.subr.bf16.mxu0 %v638
    %861 = vmatpush1.bf16.msra.mxu0 %v637
    %862 = vmatprep.subr.bf16.mxu0 %v642
    %863 = vmatpush1.bf16.msra.mxu0 %v641
    %864 = vmatprep.subr.bf16.mxu0 %v646
    %865 = vmatpush1.bf16.msra.mxu0 %v645
    %866 = vmatprep.subr.bf16.mxu0 %v650
    %867 = vmatpush1.bf16.msra.mxu0 %v649
    %868 = vmatprep.subr.bf16.mxu0 %v654
    %869 = vmatpush1.bf16.msra.mxu0 %v653
    %870 = vmatprep.subr.bf16.mxu0 %v658
    %871 = vmatpush1.bf16.msra.mxu0 %v657
    %872 = vmatprep.subr.bf16.mxu0 %v662
    %873 = vmatpush1.bf16.msra.mxu0 %v661
    %874 = vmatprep.subr.bf16.mxu0 %v666
    %875 = vmatpush1.bf16.msra.mxu0 %v665
    %876 = vmatprep.subr.bf16.mxu0 %v670
    %877 = vmatpush1.bf16.msra.mxu0 %v669
    %878 = vmatprep.subr.bf16.mxu0 %v674
    %879 = vmatpush1.bf16.msra.mxu0 %v673
    %880 = vmatprep.subr.bf16.mxu0 %v678
    %881 = vmatpush1.bf16.msra.mxu0 %v677
    %882 = vmatprep.subr.bf16.mxu0 %v809
    %883 = vmatpush1.bf16.msra.mxu0 %v806
    %884 = vmatprep.subr.bf16.mxu0 0
    %885 = vmatpush1.bf16.msra.mxu0 0
    %886 = vmatprep.subr.bf16.mxu0 0
    %887 = vmatpush1.bf16.msra.mxu0 0
    %888 = vmatprep.subr.bf16.mxu0 0
    %889 = vmatpush1.bf16.msra.mxu0 0
    %890 = vmatprep.mubr.bf16.mxu0 %v799
    %891 = vmatmul.mubr.bf16.gmra.mrb[0].mxu0 %v81
    %v892 = vpop.f32.mrb[0].mxu0
    %v893 = vadd.f32 %v852, %v892
    %v894 = vpop.f32.mrb[0].mxu0
    %v895 = vadd.f32 %v854, %v894
    %v896 = vpop.f32.mrb[0].mxu0
    %v897 = vpop.f32.mrb[0].mxu0
    %898 = vdwg.mxu0
    %899 = vmatprep.subr.bf16.mxu0 %v572
    %900 = vmatpush1.bf16.msra.mxu0 %v571
    %901 = vmatprep.subr.bf16.mxu0 %v576
    %902 = vmatpush1.bf16.msra.mxu0 %v575
    %903 = vmatprep.subr.bf16.mxu0 %v580
    %904 = vmatpush1.bf16.msra.mxu0 %v579
    %905 = vmatprep.subr.bf16.mxu0 %v584
    %906 = vmatpush1.bf16.msra.mxu0 %v583
    %907 = vmatprep.subr.bf16.mxu0 %v588
    %908 = vmatpush1.bf16.msra.mxu0 %v587
    %909 = vmatprep.subr.bf16.mxu0 %v592
    %910 = vmatpush1.bf16.msra.mxu0 %v591
    %911 = vmatprep.subr.bf16.mxu0 %v596
    %912 = vmatpush1.bf16.msra.mxu0 %v595
    %913 = vmatprep.subr.bf16.mxu0 %v600
    %914 = vmatpush1.bf16.msra.mxu0 %v599
    %915 = vmatprep.subr.bf16.mxu0 %v604
    %916 = vmatpush1.bf16.msra.mxu0 %v603
    %917 = vmatprep.subr.bf16.mxu0 %v608
    %918 = vmatpush1.bf16.msra.mxu0 %v607
    %919 = vmatprep.subr.bf16.mxu0 %v612
    %920 = vmatpush1.bf16.msra.mxu0 %v611
    %921 = vmatprep.subr.bf16.mxu0 %v616
    %922 = vmatpush1.bf16.msra.mxu0 %v615
    %923 = vmatprep.subr.bf16.mxu0 %v620
    %924 = vmatpush1.bf16.msra.mxu0 %v619
    %925 = vmatprep.subr.bf16.mxu0 %v624
    %926 = vmatpush1.bf16.msra.mxu0 %v623
    %927 = vmatprep.subr.bf16.mxu0 %v628
    %928 = vmatpush1.bf16.msra.mxu0 %v627
    %929 = vmatprep.subr.bf16.mxu0 %v632
    %930 = vmatpush1.bf16.msra.mxu0 %v631
    %931 = vmatprep.mubr.bf16.mxu0 %v80
    %932 = vmatmul.mubr.bf16.gmra.mrb[0].mxu0 %v79
    %v933 = vpop.f32.mrb[0].mxu0
    %v934 = vadd.f32 %v212, %v933
    %v935 = vpop.f32.mrb[0].mxu0
    %v936 = vadd.f32 %v216, %v935
    %v937 = vpop.f32.mrb[0].mxu0
    %v938 = vpop.f32.mrb[0].mxu0
    %939 = vdwg.mxu0
    %940 = vmatprep.subr.bf16.mxu0 %v636
    %941 = vmatpush1.bf16.msra.mxu0 %v635
    %942 = vmatprep.subr.bf16.mxu0 %v640
    %943 = vmatpush1.bf16.msra.mxu0 %v639
    %944 = vmatprep.subr.bf16.mxu0 %v644
    %945 = vmatpush1.bf16.msra.mxu0 %v643
    %946 = vmatprep.subr.bf16.mxu0 %v648
    %947 = vmatpush1.bf16.msra.mxu0 %v647
    %948 = vmatprep.subr.bf16.mxu0 %v652
    %949 = vmatpush1.bf16.msra.mxu0 %v651
    %950 = vmatprep.subr.bf16.mxu0 %v656
    %951 = vmatpush1.bf16.msra.mxu0 %v655
    %952 = vmatprep.subr.bf16.mxu0 %v660
    %953 = vmatpush1.bf16.msra.mxu0 %v659
    %954 = vmatprep.subr.bf16.mxu0 %v664
    %955 = vmatpush1.bf16.msra.mxu0 %v663
    %956 = vmatprep.subr.bf16.mxu0 %v668
    %957 = vmatpush1.bf16.msra.mxu0 %v667
    %958 = vmatprep.subr.bf16.mxu0 %v672
    %959 = vmatpush1.bf16.msra.mxu0 %v671
    %960 = vmatprep.subr.bf16.mxu0 %v676
    %961 = vmatpush1.bf16.msra.mxu0 %v675
    %962 = vmatprep.subr.bf16.mxu0 %v680
    %963 = vmatpush1.bf16.msra.mxu0 %v679
    %964 = vmatprep.subr.bf16.mxu0 %v815
    %965 = vmatpush1.bf16.msra.mxu0 %v812
    %966 = vmatprep.subr.bf16.mxu0 0
    %967 = vmatpush1.bf16.msra.mxu0 0
    %968 = vmatprep.subr.bf16.mxu0 0
    %969 = vmatpush1.bf16.msra.mxu0 0
    %970 = vmatprep.subr.bf16.mxu0 0
    %971 = vmatpush1.bf16.msra.mxu0 0
    %972 = vmatprep.mubr.bf16.mxu0 %v799
    %973 = vmatmul.mubr.bf16.gmra.mrb[0].mxu0 %v81
    %v974 = vpop.f32.mrb[0].mxu0
    %v975 = vadd.f32 %v934, %v974
    %v976 = vpop.f32.mrb[0].mxu0
    %v977 = vadd.f32 %v936, %v976
    %v978 = vpop.f32.mrb[0].mxu0
    %v979 = vpop.f32.mrb[0].mxu0
    %980 = vdwg.mxu0
    %vm981 = vcmp.gt.f32.partialorder %v893, 0.0
    %vm982 = vcmp.gt.f32.partialorder %v895, 0.0
    %vm983 = vcmp.gt.f32.partialorder %v975, 0.0
    %vm984 = vcmp.gt.f32.partialorder %v977, 0.0
    %v985 = vmul.f32 %v893, 0.01
    %v986 = vmul.f32 %v895, 0.01
    %v987 = vmul.f32 %v975, 0.01
    %v988 = vmul.f32 %v977, 0.01
    %v989 = vsel %vm981, %v893, %v985
    %v990 = vsel %vm982, %v895, %v986
    %v991 = vsel %vm983, %v975, %v987
    %v992 = vsel %vm984, %v977, %v988
    %v993 = vpack.c.bf16 %v989, %v989
    %v994 = vpack.c.bf16 %v990, %v990
    %v995 = vpack.c.bf16 %v991, %v991
    %v996 = vpack.c.bf16 %v992, %v992
    %v997 = vld [vmem:[#allocation5] sm:$0xff]
    %v998 = vld [vmem:[#allocation5 + $0x8] sm:$0xff]
    %v999 = vld [vmem:[#allocation5 + $0x10] sm:$0xff]
    %v1000 = vld [vmem:[#allocation5 + $0x18] sm:$0xff]
    %v1001 = vld [vmem:[#allocation5 + $0x20] sm:$0xff]
    %v1002 = vld [vmem:[#allocation5 + $0x28] sm:$0xff]
    %v1003 = vld [vmem:[#allocation5 + $0x30] sm:$0xff]
    %v1004 = vld [vmem:[#allocation5 + $0x38] sm:$0xff]
    %v1005 = vld [vmem:[#allocation5 + $0x40] sm:$0xff]
    %v1006 = vld [vmem:[#allocation5 + $0x48] sm:$0xff]
    %v1007 = vld [vmem:[#allocation5 + $0x50] sm:$0xff]
    %v1008 = vld [vmem:[#allocation5 + $0x58] sm:$0xff]
    %v1009 = vld [vmem:[#allocation5 + $0x60] sm:$0xff]
    %v1010 = vld [vmem:[#allocation5 + $0x68] sm:$0xff]
    %v1011 = vld [vmem:[#allocation5 + $0x70] sm:$0xff]
    %v1012 = vld [vmem:[#allocation5 + $0x78] sm:$0xff]
    %v1013 = vld [vmem:[#allocation5 + $0x80] sm:$0xff]
    %v1014 = vld [vmem:[#allocation5 + $0x88] sm:$0xff]
    %v1015 = vld [vmem:[#allocation5 + $0x90] sm:$0xff]
    %v1016 = vld [vmem:[#allocation5 + $0x98] sm:$0xff]
    %v1017 = vld [vmem:[#allocation5 + $0xa0] sm:$0xff]
    %v1018 = vld [vmem:[#allocation5 + $0xa8] sm:$0xff]
    %v1019 = vld [vmem:[#allocation5 + $0xb0] sm:$0xff]
    %v1020 = vld [vmem:[#allocation5 + $0xb8] sm:$0xff]
    %v1021 = vld [vmem:[#allocation5 + $0xc0] sm:$0xff]
    %v1022 = vld [vmem:[#allocation5 + $0xc8] sm:$0xff]
    %v1023 = vld [vmem:[#allocation5 + $0xd0] sm:$0xff]
    %v1024 = vld [vmem:[#allocation5 + $0xd8] sm:$0xff]
    %v1025 = vld [vmem:[#allocation5 + $0xe0] sm:$0xff]
    %v1026 = vld [vmem:[#allocation5 + $0xe8] sm:$0xff]
    %v1027 = vld [vmem:[#allocation5 + $0xf0] sm:$0xff]
    %v1028 = vld [vmem:[#allocation5 + $0xf8] sm:$0xff]
    %v1029 = vld [vmem:[#allocation5 + $0x100] sm:$0xff]
    %v1030 = vld [vmem:[#allocation5 + $0x108] sm:$0xff]
    %v1031 = vld [vmem:[#allocation5 + $0x110] sm:$0xff]
    %v1032 = vld [vmem:[#allocation5 + $0x118] sm:$0xff]
    %v1033 = vld [vmem:[#allocation5 + $0x120] sm:$0xff]
    %v1034 = vld [vmem:[#allocation5 + $0x128] sm:$0xff]
    %v1035 = vld [vmem:[#allocation5 + $0x130] sm:$0xff]
    %v1036 = vld [vmem:[#allocation5 + $0x138] sm:$0xff]
    %v1037 = vld [vmem:[#allocation5 + $0x140] sm:$0xff]
    %v1038 = vld [vmem:[#allocation5 + $0x148] sm:$0xff]
    %v1039 = vld [vmem:[#allocation5 + $0x150] sm:$0xff]
    %v1040 = vld [vmem:[#allocation5 + $0x158] sm:$0xff]
    %v1041 = vld [vmem:[#allocation5 + $0x160] sm:$0xff]
    %v1042 = vld [vmem:[#allocation5 + $0x168] sm:$0xff]
    %v1043 = vld [vmem:[#allocation5 + $0x170] sm:$0xff]
    %v1044 = vld [vmem:[#allocation5 + $0x178] sm:$0xff]
    %v1045 = vld [vmem:[#allocation5 + $0x180] sm:$0xff]
    %v1046 = vld [vmem:[#allocation5 + $0x188] sm:$0xff]
    %v1047 = vld [vmem:[#allocation5 + $0x190] sm:$0xff]
    %v1048 = vld [vmem:[#allocation5 + $0x198] sm:$0xff]
    %v1049 = vld [vmem:[#allocation5 + $0x1a0] sm:$0xff]
    %v1050 = vld [vmem:[#allocation5 + $0x1a8] sm:$0xff]
    %v1051 = vld [vmem:[#allocation5 + $0x1b0] sm:$0xff]
    %v1052 = vld [vmem:[#allocation5 + $0x1b8] sm:$0xff]
    %v1053 = vld [vmem:[#allocation5 + $0x1c0] sm:$0xff]
    %v1054 = vld [vmem:[#allocation5 + $0x1c8] sm:$0xff]
    %v1055 = vld [vmem:[#allocation5 + $0x1d0] sm:$0xff]
    %v1056 = vld [vmem:[#allocation5 + $0x1d8] sm:$0xff]
    %v1057 = vld [vmem:[#allocation5 + $0x1e0] sm:$0xff]
    %v1058 = vld [vmem:[#allocation5 + $0x1e8] sm:$0xff]
    %v1059 = vld [vmem:[#allocation5 + $0x1f0] sm:$0xff]
    %v1060 = vld [vmem:[#allocation5 + $0x1f8] sm:$0xff]
    %v1061 = vld [vmem:[#allocation5 + $0x200] sm:$0xff]
    %v1062 = vld [vmem:[#allocation5 + $0x208] sm:$0xff]
    %v1063 = vld [vmem:[#allocation5 + $0x210] sm:$0xff]
    %v1064 = vld [vmem:[#allocation5 + $0x218] sm:$0xff]
    %v1065 = vld [vmem:[#allocation5 + $0x220] sm:$0xff]
    %v1066 = vld [vmem:[#allocation5 + $0x228] sm:$0xff]
    %v1067 = vld [vmem:[#allocation5 + $0x230] sm:$0xff]
    %v1068 = vld [vmem:[#allocation5 + $0x238] sm:$0xff]
    %v1069 = vld [vmem:[#allocation5 + $0x240] sm:$0xff]
    %v1070 = vld [vmem:[#allocation5 + $0x248] sm:$0xff]
    %v1071 = vld [vmem:[#allocation5 + $0x250] sm:$0xff]
    %v1072 = vld [vmem:[#allocation5 + $0x258] sm:$0xff]
    %v1073 = vld [vmem:[#allocation5 + $0x260] sm:$0xff]
    %v1074 = vld [vmem:[#allocation5 + $0x268] sm:$0xff]
    %v1075 = vld [vmem:[#allocation5 + $0x270] sm:$0xff]
    %v1076 = vld [vmem:[#allocation5 + $0x278] sm:$0xff]
    %v1077 = vld [vmem:[#allocation5 + $0x280] sm:$0xff]
    %v1078 = vld [vmem:[#allocation5 + $0x288] sm:$0xff]
    %v1079 = vld [vmem:[#allocation5 + $0x290] sm:$0xff]
    %v1080 = vld [vmem:[#allocation5 + $0x298] sm:$0xff]
    %v1081 = vld [vmem:[#allocation5 + $0x2a0] sm:$0xff]
    %v1082 = vld [vmem:[#allocation5 + $0x2a8] sm:$0xff]
    %v1083 = vld [vmem:[#allocation5 + $0x2b0] sm:$0xff]
    %v1084 = vld [vmem:[#allocation5 + $0x2b8] sm:$0xff]
    %v1085 = vld [vmem:[#allocation5 + $0x2c0] sm:$0xff]
    %v1086 = vld [vmem:[#allocation5 + $0x2c8] sm:$0xff]
    %v1087 = vld [vmem:[#allocation5 + $0x2d0] sm:$0xff]
    %v1088 = vld [vmem:[#allocation5 + $0x2d8] sm:$0xff]
    %v1089 = vld [vmem:[#allocation5 + $0x2e0] sm:$0xff]
    %v1090 = vld [vmem:[#allocation5 + $0x2e8] sm:$0xff]
    %v1091 = vld [vmem:[#allocation5 + $0x2f0] sm:$0xff]
    %v1092 = vld [vmem:[#allocation5 + $0x2f8] sm:$0xff]
    %v1093 = vld [vmem:[#allocation5 + $0x300] sm:$0xff]
    %v1094 = vld [vmem:[#allocation5 + $0x308] sm:$0xff]
    %v1095 = vld [vmem:[#allocation5 + $0x310] sm:$0xff]
    %v1096 = vld [vmem:[#allocation5 + $0x318] sm:$0xff]
    %v1097 = vld [vmem:[#allocation5 + $0x320] sm:$0xff]
    %v1098 = vld [vmem:[#allocation5 + $0x328] sm:$0xff]
    %v1099 = vld [vmem:[#allocation5 + $0x330] sm:$0xff]
    %v1100 = vld [vmem:[#allocation5 + $0x338] sm:$0xff]
    %v1101 = vld [vmem:[#allocation5 + $0x340] sm:$0xff]
    %v1102 = vld [vmem:[#allocation5 + $0x348] sm:$0xff]
    %v1103 = vld [vmem:[#allocation5 + $0x350] sm:$0xff]
    %v1104 = vld [vmem:[#allocation5 + $0x358] sm:$0xff]
    %v1105 = vld [vmem:[#allocation5 + $0x360] sm:$0xff]
    %v1106 = vld [vmem:[#allocation5 + $0x368] sm:$0xff]
    %v1107 = vld [vmem:[#allocation5 + $0x370] sm:$0xff]
    %v1108 = vld [vmem:[#allocation5 + $0x378] sm:$0xff]
    %v1109 = vld [vmem:[#allocation5 + $0x380] sm:$0xff]
    %v1110 = vld [vmem:[#allocation5 + $0x388] sm:$0xff]
    %v1111 = vld [vmem:[#allocation5 + $0x390] sm:$0xff]
    %v1112 = vld [vmem:[#allocation5 + $0x398] sm:$0xff]
    %v1113 = vld [vmem:[#allocation5 + $0x3a0] sm:$0xff]
    %v1114 = vld [vmem:[#allocation5 + $0x3a8] sm:$0xff]
    %v1115 = vld [vmem:[#allocation5 + $0x3b0] sm:$0xff]
    %v1116 = vld [vmem:[#allocation5 + $0x3b8] sm:$0xff]
    %v1117 = vld [vmem:[#allocation5 + $0x3c0] sm:$0xff]
    %v1118 = vld [vmem:[#allocation5 + $0x3c8] sm:$0xff]
    %v1119 = vld [vmem:[#allocation5 + $0x3d0] sm:$0xff]
    %v1120 = vld [vmem:[#allocation5 + $0x3d8] sm:$0xff]
    %v1121 = vld [vmem:[#allocation5 + $0x3e0] sm:$0xff]
    %v1122 = vld [vmem:[#allocation5 + $0x3e8] sm:$0xff]
    %v1123 = vld [vmem:[#allocation5 + $0x3f0] sm:$0xff]
    %v1124 = vld [vmem:[#allocation5 + $0x3f8] sm:$0xff]
    %v1125 = vld [vmem:[%s4] sm:$0xf]
    %v1127 = vlaneseq
    %v1128 = vshrl.u32 %v1127, 7
    %v1129 = vsub.s32 0, %v1128
    %v1130 = vrot.slane %v1125, %v1129
    %v1131 = vlaneseq
    %v1132 = vshrl.u32 %v1131, 7
    %v1133 = vsub.s32 1, %v1132
    %v1134 = vrot.slane %v1125, %v1133
    %v1135 = vlaneseq
    %v1136 = vshrl.u32 %v1135, 7
    %v1137 = vsub.s32 2, %v1136
    %v1138 = vrot.slane %v1125, %v1137
    %v1139 = vlaneseq
    %v1140 = vshrl.u32 %v1139, 7
    %v1141 = vsub.s32 3, %v1140
    %v1142 = vrot.slane %v1125, %v1141
    %v1275 = vunpack.c.l.b16 %v997
    %v1276 = vunpack.c.h.b16 %v997
    %v1277 = vunpack.c.l.b16 %v998
    %v1278 = vunpack.c.h.b16 %v998
    %v1279 = vunpack.c.l.b16 %v999
    %v1280 = vunpack.c.h.b16 %v999
    %v1281 = vunpack.c.l.b16 %v1000
    %v1282 = vunpack.c.h.b16 %v1000
    %v1283 = vunpack.c.l.b16 %v1001
    %v1284 = vunpack.c.h.b16 %v1001
    %v1285 = vunpack.c.l.b16 %v1002
    %v1286 = vunpack.c.h.b16 %v1002
    %v1287 = vunpack.c.l.b16 %v1003
    %v1288 = vunpack.c.h.b16 %v1003
    %v1289 = vunpack.c.l.b16 %v1004
    %v1290 = vunpack.c.h.b16 %v1004
    %v1291 = vunpack.c.l.b16 %v1005
    %v1292 = vunpack.c.h.b16 %v1005
    %v1293 = vunpack.c.l.b16 %v1006
    %v1294 = vunpack.c.h.b16 %v1006
    %v1295 = vunpack.c.l.b16 %v1007
    %v1296 = vunpack.c.h.b16 %v1007
    %v1297 = vunpack.c.l.b16 %v1008
    %v1298 = vunpack.c.h.b16 %v1008
    %v1299 = vunpack.c.l.b16 %v1009
    %v1300 = vunpack.c.h.b16 %v1009
    %v1301 = vunpack.c.l.b16 %v1010
    %v1302 = vunpack.c.h.b16 %v1010
    %v1303 = vunpack.c.l.b16 %v1011
    %v1304 = vunpack.c.h.b16 %v1011
    %v1305 = vunpack.c.l.b16 %v1012
    %v1306 = vunpack.c.h.b16 %v1012
    %v1307 = vunpack.c.l.b16 %v1013
    %v1308 = vunpack.c.h.b16 %v1013
    %v1309 = vunpack.c.l.b16 %v1014
    %v1310 = vunpack.c.h.b16 %v1014
    %v1311 = vunpack.c.l.b16 %v1015
    %v1312 = vunpack.c.h.b16 %v1015
    %v1313 = vunpack.c.l.b16 %v1016
    %v1314 = vunpack.c.h.b16 %v1016
    %v1315 = vunpack.c.l.b16 %v1017
    %v1316 = vunpack.c.h.b16 %v1017
    %v1317 = vunpack.c.l.b16 %v1018
    %v1318 = vunpack.c.h.b16 %v1018
    %v1319 = vunpack.c.l.b16 %v1019
    %v1320 = vunpack.c.h.b16 %v1019
    %v1321 = vunpack.c.l.b16 %v1020
    %v1322 = vunpack.c.h.b16 %v1020
    %v1323 = vunpack.c.l.b16 %v1021
    %v1324 = vunpack.c.h.b16 %v1021
    %v1325 = vunpack.c.l.b16 %v1022
    %v1326 = vunpack.c.h.b16 %v1022
    %v1327 = vunpack.c.l.b16 %v1023
    %v1328 = vunpack.c.h.b16 %v1023
    %v1329 = vunpack.c.l.b16 %v1024
    %v1330 = vunpack.c.h.b16 %v1024
    %v1331 = vunpack.c.l.b16 %v1025
    %v1332 = vunpack.c.h.b16 %v1025
    %v1333 = vunpack.c.l.b16 %v1026
    %v1334 = vunpack.c.h.b16 %v1026
    %v1335 = vunpack.c.l.b16 %v1027
    %v1336 = vunpack.c.h.b16 %v1027
    %v1337 = vunpack.c.l.b16 %v1028
    %v1338 = vunpack.c.h.b16 %v1028
    %v1339 = vunpack.c.l.b16 %v1029
    %v1340 = vunpack.c.h.b16 %v1029
    %v1341 = vunpack.c.l.b16 %v1030
    %v1342 = vunpack.c.h.b16 %v1030
    %v1343 = vunpack.c.l.b16 %v1031
    %v1344 = vunpack.c.h.b16 %v1031
    %v1345 = vunpack.c.l.b16 %v1032
    %v1346 = vunpack.c.h.b16 %v1032
    %v1347 = vunpack.c.l.b16 %v1033
    %v1348 = vunpack.c.h.b16 %v1033
    %v1349 = vunpack.c.l.b16 %v1034
    %v1350 = vunpack.c.h.b16 %v1034
    %v1351 = vunpack.c.l.b16 %v1035
    %v1352 = vunpack.c.h.b16 %v1035
    %v1353 = vunpack.c.l.b16 %v1036
    %v1354 = vunpack.c.h.b16 %v1036
    %v1355 = vunpack.c.l.b16 %v1037
    %v1356 = vunpack.c.h.b16 %v1037
    %v1357 = vunpack.c.l.b16 %v1038
    %v1358 = vunpack.c.h.b16 %v1038
    %v1359 = vunpack.c.l.b16 %v1039
    %v1360 = vunpack.c.h.b16 %v1039
    %v1361 = vunpack.c.l.b16 %v1040
    %v1362 = vunpack.c.h.b16 %v1040
    %v1363 = vunpack.c.l.b16 %v1041
    %v1364 = vunpack.c.h.b16 %v1041
    %v1365 = vunpack.c.l.b16 %v1042
    %v1366 = vunpack.c.h.b16 %v1042
    %v1367 = vunpack.c.l.b16 %v1043
    %v1368 = vunpack.c.h.b16 %v1043
    %v1369 = vunpack.c.l.b16 %v1044
    %v1370 = vunpack.c.h.b16 %v1044
    %v1371 = vunpack.c.l.b16 %v1045
    %v1372 = vunpack.c.h.b16 %v1045
    %v1373 = vunpack.c.l.b16 %v1046
    %v1374 = vunpack.c.h.b16 %v1046
    %v1375 = vunpack.c.l.b16 %v1047
    %v1376 = vunpack.c.h.b16 %v1047
    %v1377 = vunpack.c.l.b16 %v1048
    %v1378 = vunpack.c.h.b16 %v1048
    %v1379 = vunpack.c.l.b16 %v1049
    %v1380 = vunpack.c.h.b16 %v1049
    %v1381 = vunpack.c.l.b16 %v1050
    %v1382 = vunpack.c.h.b16 %v1050
    %v1383 = vunpack.c.l.b16 %v1051
    %v1384 = vunpack.c.h.b16 %v1051
    %v1385 = vunpack.c.l.b16 %v1052
    %v1386 = vunpack.c.h.b16 %v1052
    %v1387 = vunpack.c.l.b16 %v1053
    %v1388 = vunpack.c.h.b16 %v1053
    %v1389 = vunpack.c.l.b16 %v1054
    %v1390 = vunpack.c.h.b16 %v1054
    %v1391 = vunpack.c.l.b16 %v1055
    %v1392 = vunpack.c.h.b16 %v1055
    %v1393 = vunpack.c.l.b16 %v1056
    %v1394 = vunpack.c.h.b16 %v1056
    %v1395 = vunpack.c.l.b16 %v1057
    %v1396 = vunpack.c.h.b16 %v1057
    %v1397 = vunpack.c.l.b16 %v1058
    %v1398 = vunpack.c.h.b16 %v1058
    %v1399 = vunpack.c.l.b16 %v1059
    %v1400 = vunpack.c.h.b16 %v1059
    %v1401 = vunpack.c.l.b16 %v1060
    %v1402 = vunpack.c.h.b16 %v1060
    %v1403 = vunpack.c.l.b16 %v1061
    %v1404 = vunpack.c.h.b16 %v1061
    %v1405 = vunpack.c.l.b16 %v1062
    %v1406 = vunpack.c.h.b16 %v1062
    %v1407 = vunpack.c.l.b16 %v1063
    %v1408 = vunpack.c.h.b16 %v1063
    %v1409 = vunpack.c.l.b16 %v1064
    %v1410 = vunpack.c.h.b16 %v1064
    %v1411 = vunpack.c.l.b16 %v1065
    %v1412 = vunpack.c.h.b16 %v1065
    %v1413 = vunpack.c.l.b16 %v1066
    %v1414 = vunpack.c.h.b16 %v1066
    %v1415 = vunpack.c.l.b16 %v1067
    %v1416 = vunpack.c.h.b16 %v1067
    %v1417 = vunpack.c.l.b16 %v1068
    %v1418 = vunpack.c.h.b16 %v1068
    %v1419 = vunpack.c.l.b16 %v1069
    %v1420 = vunpack.c.h.b16 %v1069
    %v1421 = vunpack.c.l.b16 %v1070
    %v1422 = vunpack.c.h.b16 %v1070
    %v1423 = vunpack.c.l.b16 %v1071
    %v1424 = vunpack.c.h.b16 %v1071
    %v1425 = vunpack.c.l.b16 %v1072
    %v1426 = vunpack.c.h.b16 %v1072
    %v1427 = vunpack.c.l.b16 %v1073
    %v1428 = vunpack.c.h.b16 %v1073
    %v1429 = vunpack.c.l.b16 %v1074
    %v1430 = vunpack.c.h.b16 %v1074
    %v1431 = vunpack.c.l.b16 %v1075
    %v1432 = vunpack.c.h.b16 %v1075
    %v1433 = vunpack.c.l.b16 %v1076
    %v1434 = vunpack.c.h.b16 %v1076
    %v1435 = vunpack.c.l.b16 %v1077
    %v1436 = vunpack.c.h.b16 %v1077
    %v1437 = vunpack.c.l.b16 %v1078
    %v1438 = vunpack.c.h.b16 %v1078
    %v1439 = vunpack.c.l.b16 %v1079
    %v1440 = vunpack.c.h.b16 %v1079
    %v1441 = vunpack.c.l.b16 %v1080
    %v1442 = vunpack.c.h.b16 %v1080
    %v1443 = vunpack.c.l.b16 %v1081
    %v1444 = vunpack.c.h.b16 %v1081
    %v1445 = vunpack.c.l.b16 %v1082
    %v1446 = vunpack.c.h.b16 %v1082
    %v1447 = vunpack.c.l.b16 %v1083
    %v1448 = vunpack.c.h.b16 %v1083
    %v1449 = vunpack.c.l.b16 %v1084
    %v1450 = vunpack.c.h.b16 %v1084
    %v1451 = vunpack.c.l.b16 %v1085
    %v1452 = vunpack.c.h.b16 %v1085
    %v1453 = vunpack.c.l.b16 %v1086
    %v1454 = vunpack.c.h.b16 %v1086
    %v1455 = vunpack.c.l.b16 %v1087
    %v1456 = vunpack.c.h.b16 %v1087
    %v1457 = vunpack.c.l.b16 %v1088
    %v1458 = vunpack.c.h.b16 %v1088
    %v1459 = vunpack.c.l.b16 %v1089
    %v1460 = vunpack.c.h.b16 %v1089
    %v1461 = vunpack.c.l.b16 %v1090
    %v1462 = vunpack.c.h.b16 %v1090
    %v1463 = vunpack.c.l.b16 %v1091
    %v1464 = vunpack.c.h.b16 %v1091
    %v1465 = vunpack.c.l.b16 %v1092
    %v1466 = vunpack.c.h.b16 %v1092
    %v1467 = vunpack.c.l.b16 %v1093
    %v1468 = vunpack.c.h.b16 %v1093
    %v1469 = vunpack.c.l.b16 %v1094
    %v1470 = vunpack.c.h.b16 %v1094
    %v1471 = vunpack.c.l.b16 %v1095
    %v1472 = vunpack.c.h.b16 %v1095
    %v1473 = vunpack.c.l.b16 %v1096
    %v1474 = vunpack.c.h.b16 %v1096
    %v1475 = vunpack.c.l.b16 %v1097
    %v1476 = vunpack.c.h.b16 %v1097
    %v1477 = vunpack.c.l.b16 %v1098
    %v1478 = vunpack.c.h.b16 %v1098
    %v1479 = vunpack.c.l.b16 %v1099
    %v1480 = vunpack.c.h.b16 %v1099
    %v1481 = vunpack.c.l.b16 %v1100
    %v1482 = vunpack.c.h.b16 %v1100
    %v1483 = vunpack.c.l.b16 %v1101
    %v1484 = vunpack.c.h.b16 %v1101
    %v1485 = vunpack.c.l.b16 %v1102
    %v1486 = vunpack.c.h.b16 %v1102
    %v1487 = vunpack.c.l.b16 %v1103
    %v1488 = vunpack.c.h.b16 %v1103
    %v1489 = vunpack.c.l.b16 %v1104
    %v1490 = vunpack.c.h.b16 %v1104
    %v1491 = vunpack.c.l.b16 %v1105
    %v1492 = vunpack.c.h.b16 %v1105
    %v1493 = vunpack.c.l.b16 %v1106
    %v1494 = vunpack.c.h.b16 %v1106
    %v1495 = vunpack.c.l.b16 %v1107
    %v1496 = vunpack.c.h.b16 %v1107
    %v1497 = vunpack.c.l.b16 %v1108
    %v1498 = vunpack.c.h.b16 %v1108
    %v1499 = vunpack.c.l.b16 %v1109
    %v1500 = vunpack.c.h.b16 %v1109
    %v1501 = vunpack.c.l.b16 %v1110
    %v1502 = vunpack.c.h.b16 %v1110
    %v1503 = vunpack.c.l.b16 %v1111
    %v1504 = vunpack.c.h.b16 %v1111
    %v1505 = vunpack.c.l.b16 %v1112
    %v1506 = vunpack.c.h.b16 %v1112
    %v1507 = vunpack.c.l.b16 %v1113
    %v1508 = vunpack.c.h.b16 %v1113
    %v1509 = vunpack.c.l.b16 %v1114
    %v1510 = vunpack.c.h.b16 %v1114
    %v1511 = vunpack.c.l.b16 %v1115
    %v1512 = vunpack.c.h.b16 %v1115
    %v1513 = vunpack.c.l.b16 %v1116
    %v1514 = vunpack.c.h.b16 %v1116
    %v1515 = vunpack.c.l.b16 %v1117
    %v1516 = vunpack.c.h.b16 %v1117
    %v1517 = vunpack.c.l.b16 %v1118
    %v1518 = vunpack.c.h.b16 %v1118
    %v1519 = vunpack.c.l.b16 %v1119
    %v1520 = vunpack.c.h.b16 %v1119
    %v1521 = vunpack.c.l.b16 %v1120
    %v1522 = vunpack.c.h.b16 %v1120
    %v1523 = vunpack.c.l.b16 %v1121
    %v1524 = vunpack.c.h.b16 %v1121
    %v1525 = vunpack.c.l.b16 %v1122
    %v1526 = vunpack.c.h.b16 %v1122
    %v1527 = vunpack.c.l.b16 %v1123
    %v1528 = vunpack.c.h.b16 %v1123
    %v1529 = vunpack.c.l.b16 %v1124
    %v1530 = vunpack.c.h.b16 %v1124
    %v1531 = vpack.c.b16 %v1279, %v1275
    %v1532 = vpack.c.b16 %v1280, %v1276
    %v1533 = vpack.c.b16 %v1281, %v1277
    %v1534 = vpack.c.b16 %v1282, %v1278
    %v1535 = vpack.c.b16 %v1287, %v1283
    %v1536 = vpack.c.b16 %v1288, %v1284
    %v1537 = vpack.c.b16 %v1289, %v1285
    %v1538 = vpack.c.b16 %v1290, %v1286
    %v1539 = vpack.c.b16 %v1295, %v1291
    %v1540 = vpack.c.b16 %v1296, %v1292
    %v1541 = vpack.c.b16 %v1297, %v1293
    %v1542 = vpack.c.b16 %v1298, %v1294
    %v1543 = vpack.c.b16 %v1303, %v1299
    %v1544 = vpack.c.b16 %v1304, %v1300
    %v1545 = vpack.c.b16 %v1305, %v1301
    %v1546 = vpack.c.b16 %v1306, %v1302
    %v1547 = vpack.c.b16 %v1311, %v1307
    %v1548 = vpack.c.b16 %v1312, %v1308
    %v1549 = vpack.c.b16 %v1313, %v1309
    %v1550 = vpack.c.b16 %v1314, %v1310
    %v1551 = vpack.c.b16 %v1319, %v1315
    %v1552 = vpack.c.b16 %v1320, %v1316
    %v1553 = vpack.c.b16 %v1321, %v1317
    %v1554 = vpack.c.b16 %v1322, %v1318
    %v1555 = vpack.c.b16 %v1327, %v1323
    %v1556 = vpack.c.b16 %v1328, %v1324
    %v1557 = vpack.c.b16 %v1329, %v1325
    %v1558 = vpack.c.b16 %v1330, %v1326
    %v1559 = vpack.c.b16 %v1335, %v1331
    %v1560 = vpack.c.b16 %v1336, %v1332
    %v1561 = vpack.c.b16 %v1337, %v1333
    %v1562 = vpack.c.b16 %v1338, %v1334
    %v1563 = vpack.c.b16 %v1343, %v1339
    %v1564 = vpack.c.b16 %v1344, %v1340
    %v1565 = vpack.c.b16 %v1345, %v1341
    %v1566 = vpack.c.b16 %v1346, %v1342
    %v1567 = vpack.c.b16 %v1351, %v1347
    %v1568 = vpack.c.b16 %v1352, %v1348
    %v1569 = vpack.c.b16 %v1353, %v1349
    %v1570 = vpack.c.b16 %v1354, %v1350
    %v1571 = vpack.c.b16 %v1359, %v1355
    %v1572 = vpack.c.b16 %v1360, %v1356
    %v1573 = vpack.c.b16 %v1361, %v1357
    %v1574 = vpack.c.b16 %v1362, %v1358
    %v1575 = vpack.c.b16 %v1367, %v1363
    %v1576 = vpack.c.b16 %v1368, %v1364
    %v1577 = vpack.c.b16 %v1369, %v1365
    %v1578 = vpack.c.b16 %v1370, %v1366
    %v1579 = vpack.c.b16 %v1375, %v1371
    %v1580 = vpack.c.b16 %v1376, %v1372
    %v1581 = vpack.c.b16 %v1377, %v1373
    %v1582 = vpack.c.b16 %v1378, %v1374
    %v1583 = vpack.c.b16 %v1383, %v1379
    %v1584 = vpack.c.b16 %v1384, %v1380
    %v1585 = vpack.c.b16 %v1385, %v1381
    %v1586 = vpack.c.b16 %v1386, %v1382
    %v1587 = vpack.c.b16 %v1391, %v1387
    %v1588 = vpack.c.b16 %v1392, %v1388
    %v1589 = vpack.c.b16 %v1393, %v1389
    %v1590 = vpack.c.b16 %v1394, %v1390
    %v1591 = vpack.c.b16 %v1399, %v1395
    %v1592 = vpack.c.b16 %v1400, %v1396
    %v1593 = vpack.c.b16 %v1401, %v1397
    %v1594 = vpack.c.b16 %v1402, %v1398
    %v1595 = vpack.c.b16 %v1407, %v1403
    %v1596 = vpack.c.b16 %v1408, %v1404
    %v1597 = vpack.c.b16 %v1409, %v1405
    %v1598 = vpack.c.b16 %v1410, %v1406
    %v1599 = vpack.c.b16 %v1415, %v1411
    %v1600 = vpack.c.b16 %v1416, %v1412
    %v1601 = vpack.c.b16 %v1417, %v1413
    %v1602 = vpack.c.b16 %v1418, %v1414
    %v1603 = vpack.c.b16 %v1423, %v1419
    %v1604 = vpack.c.b16 %v1424, %v1420
    %v1605 = vpack.c.b16 %v1425, %v1421
    %v1606 = vpack.c.b16 %v1426, %v1422
    %v1607 = vpack.c.b16 %v1431, %v1427
    %v1608 = vpack.c.b16 %v1432, %v1428
    %v1609 = vpack.c.b16 %v1433, %v1429
    %v1610 = vpack.c.b16 %v1434, %v1430
    %v1611 = vpack.c.b16 %v1439, %v1435
    %v1612 = vpack.c.b16 %v1440, %v1436
    %v1613 = vpack.c.b16 %v1441, %v1437
    %v1614 = vpack.c.b16 %v1442, %v1438
    %v1615 = vpack.c.b16 %v1447, %v1443
    %v1616 = vpack.c.b16 %v1448, %v1444
    %v1617 = vpack.c.b16 %v1449, %v1445
    %v1618 = vpack.c.b16 %v1450, %v1446
    %v1619 = vpack.c.b16 %v1455, %v1451
    %v1620 = vpack.c.b16 %v1456, %v1452
    %v1621 = vpack.c.b16 %v1457, %v1453
    %v1622 = vpack.c.b16 %v1458, %v1454
    %v1623 = vpack.c.b16 %v1463, %v1459
    %v1624 = vpack.c.b16 %v1464, %v1460
    %v1625 = vpack.c.b16 %v1465, %v1461
    %v1626 = vpack.c.b16 %v1466, %v1462
    %v1627 = vpack.c.b16 %v1471, %v1467
    %v1628 = vpack.c.b16 %v1472, %v1468
    %v1629 = vpack.c.b16 %v1473, %v1469
    %v1630 = vpack.c.b16 %v1474, %v1470
    %v1631 = vpack.c.b16 %v1479, %v1475
    %v1632 = vpack.c.b16 %v1480, %v1476
    %v1633 = vpack.c.b16 %v1481, %v1477
    %v1634 = vpack.c.b16 %v1482, %v1478
    %v1635 = vpack.c.b16 %v1487, %v1483
    %v1636 = vpack.c.b16 %v1488, %v1484
    %v1637 = vpack.c.b16 %v1489, %v1485
    %v1638 = vpack.c.b16 %v1490, %v1486
    %v1639 = vpack.c.b16 %v1495, %v1491
    %v1640 = vpack.c.b16 %v1496, %v1492
    %v1641 = vpack.c.b16 %v1497, %v1493
    %v1642 = vpack.c.b16 %v1498, %v1494
    %v1643 = vpack.c.b16 %v1503, %v1499
    %v1644 = vpack.c.b16 %v1504, %v1500
    %v1645 = vpack.c.b16 %v1505, %v1501
    %v1646 = vpack.c.b16 %v1506, %v1502
    %v1647 = vpack.c.b16 %v1511, %v1507
    %v1648 = vpack.c.b16 %v1512, %v1508
    %v1649 = vpack.c.b16 %v1513, %v1509
    %v1650 = vpack.c.b16 %v1514, %v1510
    %v1651 = vpack.c.b16 %v1519, %v1515
    %v1652 = vpack.c.b16 %v1520, %v1516
    %v1653 = vpack.c.b16 %v1521, %v1517
    %v1654 = vpack.c.b16 %v1522, %v1518
    %v1655 = vpack.c.b16 %v1527, %v1523
    %v1656 = vpack.c.b16 %v1528, %v1524
    %v1657 = vpack.c.b16 %v1529, %v1525
    %v1658 = vpack.c.b16 %v1530, %v1526
    %1787 = vmatprep.subr.bf16.mxu0 %v1532
    %1788 = vmatpush1.bf16.msra.mxu0 %v1531
    %1789 = vmatprep.subr.bf16.mxu0 %v1536
    %1790 = vmatpush1.bf16.msra.mxu0 %v1535
    %1791 = vmatprep.subr.bf16.mxu0 %v1540
    %1792 = vmatpush1.bf16.msra.mxu0 %v1539
    %1793 = vmatprep.subr.bf16.mxu0 %v1544
    %1794 = vmatpush1.bf16.msra.mxu0 %v1543
    %1795 = vmatprep.subr.bf16.mxu0 %v1548
    %1796 = vmatpush1.bf16.msra.mxu0 %v1547
    %1797 = vmatprep.subr.bf16.mxu0 %v1552
    %1798 = vmatpush1.bf16.msra.mxu0 %v1551
    %1799 = vmatprep.subr.bf16.mxu0 %v1556
    %1800 = vmatpush1.bf16.msra.mxu0 %v1555
    %1801 = vmatprep.subr.bf16.mxu0 %v1560
    %1802 = vmatpush1.bf16.msra.mxu0 %v1559
    %1803 = vmatprep.subr.bf16.mxu0 %v1564
    %1804 = vmatpush1.bf16.msra.mxu0 %v1563
    %1805 = vmatprep.subr.bf16.mxu0 %v1568
    %1806 = vmatpush1.bf16.msra.mxu0 %v1567
    %1807 = vmatprep.subr.bf16.mxu0 %v1572
    %1808 = vmatpush1.bf16.msra.mxu0 %v1571
    %1809 = vmatprep.subr.bf16.mxu0 %v1576
    %1810 = vmatpush1.bf16.msra.mxu0 %v1575
    %1811 = vmatprep.subr.bf16.mxu0 %v1580
    %1812 = vmatpush1.bf16.msra.mxu0 %v1579
    %1813 = vmatprep.subr.bf16.mxu0 %v1584
    %1814 = vmatpush1.bf16.msra.mxu0 %v1583
    %1815 = vmatprep.subr.bf16.mxu0 %v1588
    %1816 = vmatpush1.bf16.msra.mxu0 %v1587
    %1817 = vmatprep.subr.bf16.mxu0 %v1592
    %1818 = vmatpush1.bf16.msra.mxu0 %v1591
    %1819 = vmatprep.mubr.bf16.mxu0 %v994
    %1820 = vmatmul.mubr.bf16.gmra.mrb[0].mxu0 %v993
    %v1821 = vpop.f32.mrb[0].mxu0
    %v1822 = vadd.f32 %v1130, %v1821
    %v1823 = vpop.f32.mrb[0].mxu0
    %v1824 = vadd.f32 %v1134, %v1823
    %v1825 = vpop.f32.mrb[0].mxu0
    %v1826 = vpop.f32.mrb[0].mxu0
    %1827 = vdwg.mxu0
    %1828 = vmatprep.subr.bf16.mxu0 %v1596
    %1829 = vmatpush1.bf16.msra.mxu0 %v1595
    %1830 = vmatprep.subr.bf16.mxu0 %v1600
    %1831 = vmatpush1.bf16.msra.mxu0 %v1599
    %1832 = vmatprep.subr.bf16.mxu0 %v1604
    %1833 = vmatpush1.bf16.msra.mxu0 %v1603
    %1834 = vmatprep.subr.bf16.mxu0 %v1608
    %1835 = vmatpush1.bf16.msra.mxu0 %v1607
    %1836 = vmatprep.subr.bf16.mxu0 %v1612
    %1837 = vmatpush1.bf16.msra.mxu0 %v1611
    %1838 = vmatprep.subr.bf16.mxu0 %v1616
    %1839 = vmatpush1.bf16.msra.mxu0 %v1615
    %1840 = vmatprep.subr.bf16.mxu0 %v1620
    %1841 = vmatpush1.bf16.msra.mxu0 %v1619
    %1842 = vmatprep.subr.bf16.mxu0 %v1624
    %1843 = vmatpush1.bf16.msra.mxu0 %v1623
    %1844 = vmatprep.subr.bf16.mxu0 %v1628
    %1845 = vmatpush1.bf16.msra.mxu0 %v1627
    %1846 = vmatprep.subr.bf16.mxu0 %v1632
    %1847 = vmatpush1.bf16.msra.mxu0 %v1631
    %1848 = vmatprep.subr.bf16.mxu0 %v1636
    %1849 = vmatpush1.bf16.msra.mxu0 %v1635
    %1850 = vmatprep.subr.bf16.mxu0 %v1640
    %1851 = vmatpush1.bf16.msra.mxu0 %v1639
    %1852 = vmatprep.subr.bf16.mxu0 %v1644
    %1853 = vmatpush1.bf16.msra.mxu0 %v1643
    %1854 = vmatprep.subr.bf16.mxu0 %v1648
    %1855 = vmatpush1.bf16.msra.mxu0 %v1647
    %1856 = vmatprep.subr.bf16.mxu0 %v1652
    %1857 = vmatpush1.bf16.msra.mxu0 %v1651
    %1858 = vmatprep.subr.bf16.mxu0 %v1656
    %1859 = vmatpush1.bf16.msra.mxu0 %v1655
    %1860 = vmatprep.mubr.bf16.mxu0 %v996
    %1861 = vmatmul.mubr.bf16.gmra.mrb[0].mxu0 %v995
    %v1862 = vpop.f32.mrb[0].mxu0
    %v1863 = vadd.f32 %v1822, %v1862
    %v1864 = vpop.f32.mrb[0].mxu0
    %v1865 = vadd.f32 %v1824, %v1864
    %v1866 = vpop.f32.mrb[0].mxu0
    %v1867 = vpop.f32.mrb[0].mxu0
    %1868 = vdwg.mxu0
    %1869 = vmatprep.subr.bf16.mxu0 %v1534
    %1870 = vmatpush1.bf16.msra.mxu0 %v1533
    %1871 = vmatprep.subr.bf16.mxu0 %v1538
    %1872 = vmatpush1.bf16.msra.mxu0 %v1537
    %1873 = vmatprep.subr.bf16.mxu0 %v1542
    %1874 = vmatpush1.bf16.msra.mxu0 %v1541
    %1875 = vmatprep.subr.bf16.mxu0 %v1546
    %1876 = vmatpush1.bf16.msra.mxu0 %v1545
    %1877 = vmatprep.subr.bf16.mxu0 %v1550
    %1878 = vmatpush1.bf16.msra.mxu0 %v1549
    %1879 = vmatprep.subr.bf16.mxu0 %v1554
    %1880 = vmatpush1.bf16.msra.mxu0 %v1553
    %1881 = vmatprep.subr.bf16.mxu0 %v1558
    %1882 = vmatpush1.bf16.msra.mxu0 %v1557
    %1883 = vmatprep.subr.bf16.mxu0 %v1562
    %1884 = vmatpush1.bf16.msra.mxu0 %v1561
    %1885 = vmatprep.subr.bf16.mxu0 %v1566
    %1886 = vmatpush1.bf16.msra.mxu0 %v1565
    %1887 = vmatprep.subr.bf16.mxu0 %v1570
    %1888 = vmatpush1.bf16.msra.mxu0 %v1569
    %1889 = vmatprep.subr.bf16.mxu0 %v1574
    %1890 = vmatpush1.bf16.msra.mxu0 %v1573
    %1891 = vmatprep.subr.bf16.mxu0 %v1578
    %1892 = vmatpush1.bf16.msra.mxu0 %v1577
    %1893 = vmatprep.subr.bf16.mxu0 %v1582
    %1894 = vmatpush1.bf16.msra.mxu0 %v1581
    %1895 = vmatprep.subr.bf16.mxu0 %v1586
    %1896 = vmatpush1.bf16.msra.mxu0 %v1585
    %1897 = vmatprep.subr.bf16.mxu0 %v1590
    %1898 = vmatpush1.bf16.msra.mxu0 %v1589
    %1899 = vmatprep.subr.bf16.mxu0 %v1594
    %1900 = vmatpush1.bf16.msra.mxu0 %v1593
    %1901 = vmatprep.mubr.bf16.mxu0 %v994
    %1902 = vmatmul.mubr.bf16.gmra.mrb[0].mxu0 %v993
    %v1903 = vpop.f32.mrb[0].mxu0
    %v1904 = vadd.f32 %v1138, %v1903
    %v1905 = vpop.f32.mrb[0].mxu0
    %v1906 = vadd.f32 %v1142, %v1905
    %v1907 = vpop.f32.mrb[0].mxu0
    %v1908 = vpop.f32.mrb[0].mxu0
    %1909 = vdwg.mxu0
    %1910 = vmatprep.subr.bf16.mxu0 %v1598
    %1911 = vmatpush1.bf16.msra.mxu0 %v1597
    %1912 = vmatprep.subr.bf16.mxu0 %v1602
    %1913 = vmatpush1.bf16.msra.mxu0 %v1601
    %1914 = vmatprep.subr.bf16.mxu0 %v1606
    %1915 = vmatpush1.bf16.msra.mxu0 %v1605
    %1916 = vmatprep.subr.bf16.mxu0 %v1610
    %1917 = vmatpush1.bf16.msra.mxu0 %v1609
    %1918 = vmatprep.subr.bf16.mxu0 %v1614
    %1919 = vmatpush1.bf16.msra.mxu0 %v1613
    %1920 = vmatprep.subr.bf16.mxu0 %v1618
    %1921 = vmatpush1.bf16.msra.mxu0 %v1617
    %1922 = vmatprep.subr.bf16.mxu0 %v1622
    %1923 = vmatpush1.bf16.msra.mxu0 %v1621
    %1924 = vmatprep.subr.bf16.mxu0 %v1626
    %1925 = vmatpush1.bf16.msra.mxu0 %v1625
    %1926 = vmatprep.subr.bf16.mxu0 %v1630
    %1927 = vmatpush1.bf16.msra.mxu0 %v1629
    %1928 = vmatprep.subr.bf16.mxu0 %v1634
    %1929 = vmatpush1.bf16.msra.mxu0 %v1633
    %1930 = vmatprep.subr.bf16.mxu0 %v1638
    %1931 = vmatpush1.bf16.msra.mxu0 %v1637
    %1932 = vmatprep.subr.bf16.mxu0 %v1642
    %1933 = vmatpush1.bf16.msra.mxu0 %v1641
    %1934 = vmatprep.subr.bf16.mxu0 %v1646
    %1935 = vmatpush1.bf16.msra.mxu0 %v1645
    %1936 = vmatprep.subr.bf16.mxu0 %v1650
    %1937 = vmatpush1.bf16.msra.mxu0 %v1649
    %1938 = vmatprep.subr.bf16.mxu0 %v1654
    %1939 = vmatpush1.bf16.msra.mxu0 %v1653
    %1940 = vmatprep.subr.bf16.mxu0 %v1658
    %1941 = vmatpush1.bf16.msra.mxu0 %v1657
    %1942 = vmatprep.mubr.bf16.mxu0 %v996
    %1943 = vmatmul.mubr.bf16.gmra.mrb[0].mxu0 %v995
    %v1944 = vpop.f32.mrb[0].mxu0
    %v1945 = vadd.f32 %v1904, %v1944
    %v1946 = vpop.f32.mrb[0].mxu0
    %v1947 = vadd.f32 %v1906, %v1946
    %v1948 = vpop.f32.mrb[0].mxu0
    %v1949 = vpop.f32.mrb[0].mxu0
    %1950 = vdwg.mxu0
    %vm1951 = vcmp.gt.f32.partialorder %v1863, 0.0
    %vm1952 = vcmp.gt.f32.partialorder %v1865, 0.0
    %vm1953 = vcmp.gt.f32.partialorder %v1945, 0.0
    %vm1954 = vcmp.gt.f32.partialorder %v1947, 0.0
    %v1955 = vmul.f32 %v1863, 0.01
    %v1956 = vmul.f32 %v1865, 0.01
    %v1957 = vmul.f32 %v1945, 0.01
    %v1958 = vmul.f32 %v1947, 0.01
    %v1959 = vsel %vm1951, %v1863, %v1955
    %v1960 = vsel %vm1952, %v1865, %v1956
    %v1961 = vsel %vm1953, %v1945, %v1957
    %v1962 = vsel %vm1954, %v1947, %v1958
    %v1963 = vpack.c.bf16 %v1959, %v1959
    %v1964 = vpack.c.bf16 %v1960, %v1960
    %v1965 = vpack.c.bf16 %v1961, %v1961
    %v1966 = vpack.c.bf16 %v1962, %v1962
    %v1967 = vld [vmem:[#allocation7] sm:$0xf]
    %v1968 = vld [vmem:[#allocation7 + $0x4] sm:$0xf]
    %v1969 = vld [vmem:[#allocation7 + $0x8] sm:$0xf]
    %v1970 = vld [vmem:[#allocation7 + $0xc] sm:$0xf]
    %v1971 = vld [vmem:[#allocation7 + $0x10] sm:$0xf]
    %v1972 = vld [vmem:[#allocation7 + $0x14] sm:$0xf]
    %v1973 = vld [vmem:[#allocation7 + $0x18] sm:$0xf]
    %v1974 = vld [vmem:[#allocation7 + $0x1c] sm:$0xf]
    %v1975 = vld [vmem:[#allocation7 + $0x20] sm:$0xf]
    %v1976 = vld [vmem:[#allocation7 + $0x24] sm:$0xf]
    %v1977 = vld [vmem:[#allocation7 + $0x28] sm:$0xf]
    %v1978 = vld [vmem:[#allocation7 + $0x2c] sm:$0xf]
    %v1979 = vld [vmem:[#allocation7 + $0x30] sm:$0xf]
    %v1980 = vld [vmem:[#allocation7 + $0x34] sm:$0xf]
    %v1981 = vld [vmem:[#allocation7 + $0x38] sm:$0xf]
    %v1982 = vld [vmem:[#allocation7 + $0x3c] sm:$0xf]
    %v1983 = vld [vmem:[#allocation7 + $0x40] sm:$0xf]
    %v1984 = vld [vmem:[#allocation7 + $0x44] sm:$0xf]
    %v1985 = vld [vmem:[#allocation7 + $0x48] sm:$0xf]
    %v1986 = vld [vmem:[#allocation7 + $0x4c] sm:$0xf]
    %v1987 = vld [vmem:[#allocation7 + $0x50] sm:$0xf]
    %v1988 = vld [vmem:[#allocation7 + $0x54] sm:$0xf]
    %v1989 = vld [vmem:[#allocation7 + $0x58] sm:$0xf]
    %v1990 = vld [vmem:[#allocation7 + $0x5c] sm:$0xf]
    %v1991 = vld [vmem:[#allocation7 + $0x60] sm:$0xf]
    %v1992 = vld [vmem:[#allocation7 + $0x64] sm:$0xf]
    %v1993 = vld [vmem:[#allocation7 + $0x68] sm:$0xf]
    %v1994 = vld [vmem:[#allocation7 + $0x6c] sm:$0xf]
    %v1995 = vld [vmem:[#allocation7 + $0x70] sm:$0xf]
    %v1996 = vld [vmem:[#allocation7 + $0x74] sm:$0xf]
    %v1997 = vld [vmem:[#allocation7 + $0x78] sm:$0xf]
    %v1998 = vld [vmem:[#allocation7 + $0x7c] sm:$0xf]
    %v1999 = vld [vmem:[#allocation7 + $0x80] sm:$0xf]
    %v2000 = vld [vmem:[#allocation7 + $0x84] sm:$0xf]
    %v2001 = vld [vmem:[#allocation7 + $0x88] sm:$0xf]
    %v2002 = vld [vmem:[#allocation7 + $0x8c] sm:$0xf]
    %v2003 = vld [vmem:[#allocation7 + $0x90] sm:$0xf]
    %v2004 = vld [vmem:[#allocation7 + $0x94] sm:$0xf]
    %v2005 = vld [vmem:[#allocation7 + $0x98] sm:$0xf]
    %v2006 = vld [vmem:[#allocation7 + $0x9c] sm:$0xf]
    %v2007 = vld [vmem:[#allocation7 + $0xa0] sm:$0xf]
    %v2008 = vld [vmem:[#allocation7 + $0xa4] sm:$0xf]
    %v2009 = vld [vmem:[#allocation7 + $0xa8] sm:$0xf]
    %v2010 = vld [vmem:[#allocation7 + $0xac] sm:$0xf]
    %v2011 = vld [vmem:[#allocation7 + $0xb0] sm:$0xf]
    %v2012 = vld [vmem:[#allocation7 + $0xb4] sm:$0xf]
    %v2013 = vld [vmem:[#allocation7 + $0xb8] sm:$0xf]
    %v2014 = vld [vmem:[#allocation7 + $0xbc] sm:$0xf]
    %v2015 = vld [vmem:[#allocation7 + $0xc0] sm:$0xf]
    %v2016 = vld [vmem:[#allocation7 + $0xc4] sm:$0xf]
    %v2017 = vld [vmem:[#allocation7 + $0xc8] sm:$0xf]
    %v2018 = vld [vmem:[#allocation7 + $0xcc] sm:$0xf]
    %v2019 = vld [vmem:[#allocation7 + $0xd0] sm:$0xf]
    %v2020 = vld [vmem:[#allocation7 + $0xd4] sm:$0xf]
    %v2021 = vld [vmem:[#allocation7 + $0xd8] sm:$0xf]
    %v2022 = vld [vmem:[#allocation7 + $0xdc] sm:$0xf]
    %v2023 = vld [vmem:[#allocation7 + $0xe0] sm:$0xf]
    %v2024 = vld [vmem:[#allocation7 + $0xe4] sm:$0xf]
    %v2025 = vld [vmem:[#allocation7 + $0xe8] sm:$0xf]
    %v2026 = vld [vmem:[#allocation7 + $0xec] sm:$0xf]
    %v2027 = vld [vmem:[#allocation7 + $0xf0] sm:$0xf]
    %v2028 = vld [vmem:[#allocation7 + $0xf4] sm:$0xf]
    %v2029 = vld [vmem:[#allocation7 + $0xf8] sm:$0xf]
    %v2030 = vld [vmem:[#allocation7 + $0xfc] sm:$0xf]
    %v2031 = vld [vmem:[%s6] sm:$0x1]
    %v2033 = vlaneseq
    %v2034 = vshrl.u32 %v2033, 7
    %v2035 = vsub.s32 0, %v2034
    %v2036 = vrot.slane %v2031, %v2035
    %v2102 = vunpack.c.l.b16 %v1967
    %v2103 = vunpack.c.l.b16 %v1968
    %v2104 = vunpack.c.l.b16 %v1969
    %v2105 = vunpack.c.l.b16 %v1970
    %v2106 = vunpack.c.l.b16 %v1971
    %v2107 = vunpack.c.l.b16 %v1972
    %v2108 = vunpack.c.l.b16 %v1973
    %v2109 = vunpack.c.l.b16 %v1974
    %v2110 = vunpack.c.l.b16 %v1975
    %v2111 = vunpack.c.l.b16 %v1976
    %v2112 = vunpack.c.l.b16 %v1977
    %v2113 = vunpack.c.l.b16 %v1978
    %v2114 = vunpack.c.l.b16 %v1979
    %v2115 = vunpack.c.l.b16 %v1980
    %v2116 = vunpack.c.l.b16 %v1981
    %v2117 = vunpack.c.l.b16 %v1982
    %v2118 = vunpack.c.l.b16 %v1983
    %v2119 = vunpack.c.l.b16 %v1984
    %v2120 = vunpack.c.l.b16 %v1985
    %v2121 = vunpack.c.l.b16 %v1986
    %v2122 = vunpack.c.l.b16 %v1987
    %v2123 = vunpack.c.l.b16 %v1988
    %v2124 = vunpack.c.l.b16 %v1989
    %v2125 = vunpack.c.l.b16 %v1990
    %v2126 = vunpack.c.l.b16 %v1991
    %v2127 = vunpack.c.l.b16 %v1992
    %v2128 = vunpack.c.l.b16 %v1993
    %v2129 = vunpack.c.l.b16 %v1994
    %v2130 = vunpack.c.l.b16 %v1995
    %v2131 = vunpack.c.l.b16 %v1996
    %v2132 = vunpack.c.l.b16 %v1997
    %v2133 = vunpack.c.l.b16 %v1998
    %v2134 = vunpack.c.l.b16 %v1999
    %v2135 = vunpack.c.l.b16 %v2000
    %v2136 = vunpack.c.l.b16 %v2001
    %v2137 = vunpack.c.l.b16 %v2002
    %v2138 = vunpack.c.l.b16 %v2003
    %v2139 = vunpack.c.l.b16 %v2004
    %v2140 = vunpack.c.l.b16 %v2005
    %v2141 = vunpack.c.l.b16 %v2006
    %v2142 = vunpack.c.l.b16 %v2007
    %v2143 = vunpack.c.l.b16 %v2008
    %v2144 = vunpack.c.l.b16 %v2009
    %v2145 = vunpack.c.l.b16 %v2010
    %v2146 = vunpack.c.l.b16 %v2011
    %v2147 = vunpack.c.l.b16 %v2012
    %v2148 = vunpack.c.l.b16 %v2013
    %v2149 = vunpack.c.l.b16 %v2014
    %v2150 = vunpack.c.l.b16 %v2015
    %v2151 = vunpack.c.l.b16 %v2016
    %v2152 = vunpack.c.l.b16 %v2017
    %v2153 = vunpack.c.l.b16 %v2018
    %v2154 = vunpack.c.l.b16 %v2019
    %v2155 = vunpack.c.l.b16 %v2020
    %v2156 = vunpack.c.l.b16 %v2021
    %v2157 = vunpack.c.l.b16 %v2022
    %v2158 = vunpack.c.l.b16 %v2023
    %v2159 = vunpack.c.l.b16 %v2024
    %v2160 = vunpack.c.l.b16 %v2025
    %v2161 = vunpack.c.l.b16 %v2026
    %v2162 = vunpack.c.l.b16 %v2027
    %v2163 = vunpack.c.l.b16 %v2028
    %v2164 = vunpack.c.l.b16 %v2029
    %v2165 = vunpack.c.l.b16 %v2030
    %v2166 = vpack.c.b16 %v2103, %v2102
    %v2167 = vpack.c.b16 %v2105, %v2104
    %v2168 = vpack.c.b16 %v2107, %v2106
    %v2169 = vpack.c.b16 %v2109, %v2108
    %v2170 = vpack.c.b16 %v2111, %v2110
    %v2171 = vpack.c.b16 %v2113, %v2112
    %v2172 = vpack.c.b16 %v2115, %v2114
    %v2173 = vpack.c.b16 %v2117, %v2116
    %v2174 = vpack.c.b16 %v2119, %v2118
    %v2175 = vpack.c.b16 %v2121, %v2120
    %v2176 = vpack.c.b16 %v2123, %v2122
    %v2177 = vpack.c.b16 %v2125, %v2124
    %v2178 = vpack.c.b16 %v2127, %v2126
    %v2179 = vpack.c.b16 %v2129, %v2128
    %v2180 = vpack.c.b16 %v2131, %v2130
    %v2181 = vpack.c.b16 %v2133, %v2132
    %v2182 = vpack.c.b16 %v2135, %v2134
    %v2183 = vpack.c.b16 %v2137, %v2136
    %v2184 = vpack.c.b16 %v2139, %v2138
    %v2185 = vpack.c.b16 %v2141, %v2140
    %v2186 = vpack.c.b16 %v2143, %v2142
    %v2187 = vpack.c.b16 %v2145, %v2144
    %v2188 = vpack.c.b16 %v2147, %v2146
    %v2189 = vpack.c.b16 %v2149, %v2148
    %v2190 = vpack.c.b16 %v2151, %v2150
    %v2191 = vpack.c.b16 %v2153, %v2152
    %v2192 = vpack.c.b16 %v2155, %v2154
    %v2193 = vpack.c.b16 %v2157, %v2156
    %v2194 = vpack.c.b16 %v2159, %v2158
    %v2195 = vpack.c.b16 %v2161, %v2160
    %v2196 = vpack.c.b16 %v2163, %v2162
    %v2197 = vpack.c.b16 %v2165, %v2164
    %2230 = vmatprep.subr.bf16.mxu0 0
    %2231 = vmatpush1.bf16.msra.mxu0 %v2166
    %2232 = vmatprep.subr.bf16.mxu0 0
    %2233 = vmatpush1.bf16.msra.mxu0 %v2167
    %2234 = vmatprep.subr.bf16.mxu0 0
    %2235 = vmatpush1.bf16.msra.mxu0 %v2168
    %2236 = vmatprep.subr.bf16.mxu0 0
    %2237 = vmatpush1.bf16.msra.mxu0 %v2169
    %2238 = vmatprep.subr.bf16.mxu0 0
    %2239 = vmatpush1.bf16.msra.mxu0 %v2170
    %2240 = vmatprep.subr.bf16.mxu0 0
    %2241 = vmatpush1.bf16.msra.mxu0 %v2171
    %2242 = vmatprep.subr.bf16.mxu0 0
    %2243 = vmatpush1.bf16.msra.mxu0 %v2172
    %2244 = vmatprep.subr.bf16.mxu0 0
    %2245 = vmatpush1.bf16.msra.mxu0 %v2173
    %2246 = vmatprep.subr.bf16.mxu0 0
    %2247 = vmatpush1.bf16.msra.mxu0 %v2174
    %2248 = vmatprep.subr.bf16.mxu0 0
    %2249 = vmatpush1.bf16.msra.mxu0 %v2175
    %2250 = vmatprep.subr.bf16.mxu0 0
    %2251 = vmatpush1.bf16.msra.mxu0 %v2176
    %2252 = vmatprep.subr.bf16.mxu0 0
    %2253 = vmatpush1.bf16.msra.mxu0 %v2177
    %2254 = vmatprep.subr.bf16.mxu0 0
    %2255 = vmatpush1.bf16.msra.mxu0 %v2178
    %2256 = vmatprep.subr.bf16.mxu0 0
    %2257 = vmatpush1.bf16.msra.mxu0 %v2179
    %2258 = vmatprep.subr.bf16.mxu0 0
    %2259 = vmatpush1.bf16.msra.mxu0 %v2180
    %2260 = vmatprep.subr.bf16.mxu0 0
    %2261 = vmatpush1.bf16.msra.mxu0 %v2181
    %2262 = vmatprep.mubr.bf16.mxu0 %v1964
    %2263 = vmatmul.mubr.bf16.gmra.mrb[0].mxu0 %v1963
    %v2264 = vpop.f32.mrb[0].mxu0
    %v2265 = vadd.f32 %v2036, %v2264
    %v2266 = vpop.f32.mrb[0].mxu0
    %v2267 = vpop.f32.mrb[0].mxu0
    %v2268 = vpop.f32.mrb[0].mxu0
    %2269 = vdwg.mxu0
    %2270 = vmatprep.subr.bf16.mxu0 0
    %2271 = vmatpush1.bf16.msra.mxu0 %v2182
    %2272 = vmatprep.subr.bf16.mxu0 0
    %2273 = vmatpush1.bf16.msra.mxu0 %v2183
    %2274 = vmatprep.subr.bf16.mxu0 0
    %2275 = vmatpush1.bf16.msra.mxu0 %v2184
    %2276 = vmatprep.subr.bf16.mxu0 0
    %2277 = vmatpush1.bf16.msra.mxu0 %v2185
    %2278 = vmatprep.subr.bf16.mxu0 0
    %2279 = vmatpush1.bf16.msra.mxu0 %v2186
    %2280 = vmatprep.subr.bf16.mxu0 0
    %2281 = vmatpush1.bf16.msra.mxu0 %v2187
    %2282 = vmatprep.subr.bf16.mxu0 0
    %2283 = vmatpush1.bf16.msra.mxu0 %v2188
    %2284 = vmatprep.subr.bf16.mxu0 0
    %2285 = vmatpush1.bf16.msra.mxu0 %v2189
    %2286 = vmatprep.subr.bf16.mxu0 0
    %2287 = vmatpush1.bf16.msra.mxu0 %v2190
    %2288 = vmatprep.subr.bf16.mxu0 0
    %2289 = vmatpush1.bf16.msra.mxu0 %v2191
    %2290 = vmatprep.subr.bf16.mxu0 0
    %2291 = vmatpush1.bf16.msra.mxu0 %v2192
    %2292 = vmatprep.subr.bf16.mxu0 0
    %2293 = vmatpush1.bf16.msra.mxu0 %v2193
    %2294 = vmatprep.subr.bf16.mxu0 0
    %2295 = vmatpush1.bf16.msra.mxu0 %v2194
    %2296 = vmatprep.subr.bf16.mxu0 0
    %2297 = vmatpush1.bf16.msra.mxu0 %v2195
    %2298 = vmatprep.subr.bf16.mxu0 0
    %2299 = vmatpush1.bf16.msra.mxu0 %v2196
    %2300 = vmatprep.subr.bf16.mxu0 0
    %2301 = vmatpush1.bf16.msra.mxu0 %v2197
    %2302 = vmatprep.mubr.bf16.mxu0 %v1966
    %2303 = vmatmul.mubr.bf16.gmra.mrb[0].mxu0 %v1965
    %v2304 = vpop.f32.mrb[0].mxu0
    %v2305 = vadd.f32 %v2265, %v2304
    %v2306 = vpop.f32.mrb[0].mxu0
    %v2307 = vpop.f32.mrb[0].mxu0
    %v2308 = vpop.f32.mrb[0].mxu0
    %2309 = vdwg.mxu0
    %vm2310 = vcmp.gt.f32.partialorder %v2305, 0.0
    %v2311 = vmul.f32 %v2305, 0.01
    %v2312 = vsel %vm2310, %v2305, %v2311
    %v2313 = vpack.c.bf16 %v2312, %v2312
    %v2314 = vld [vmem:[%s7] sm:$0xf]
    %v2315 = vld [vmem:[%s7 + $0x4] sm:$0xf]
    %v2316 = vld [vmem:[%s7 + $0x8] sm:$0xf]
    %v2317 = vld [vmem:[%s7 + $0xc] sm:$0xf]
    %v2318 = vld [vmem:[%s7 + $0x10] sm:$0xf]
    %v2319 = vld [vmem:[%s7 + $0x14] sm:$0xf]
    %v2320 = vld [vmem:[%s7 + $0x18] sm:$0xf]
    %v2321 = vld [vmem:[%s7 + $0x1c] sm:$0xf]
    %v2322 = vld [vmem:[%s7 + $0x20] sm:$0xf]
    %v2323 = vld [vmem:[%s7 + $0x24] sm:$0xf]
    %v2324 = vld [vmem:[%s7 + $0x28] sm:$0xf]
    %v2325 = vld [vmem:[%s7 + $0x2c] sm:$0xf]
    %v2326 = vld [vmem:[%s7 + $0x30] sm:$0xf]
    %v2327 = vld [vmem:[%s7 + $0x34] sm:$0xf]
    %v2328 = vld [vmem:[%s7 + $0x38] sm:$0xf]
    %v2329 = vld [vmem:[%s7 + $0x3c] sm:$0xf]
    %v2330 = vld [vmem:[%s8] sm:$0x1]
    %v2332 = vlaneseq
    %v2333 = vshrl.u32 %v2332, 7
    %v2334 = vsub.s32 0, %v2333
    %v2335 = vrot.slane %v2330, %v2334
    %v2353 = vunpack.c.l.b16 %v2314
    %v2354 = vunpack.c.l.b16 %v2315
    %v2355 = vunpack.c.l.b16 %v2316
    %v2356 = vunpack.c.l.b16 %v2317
    %v2357 = vunpack.c.l.b16 %v2318
    %v2358 = vunpack.c.l.b16 %v2319
    %v2359 = vunpack.c.l.b16 %v2320
    %v2360 = vunpack.c.l.b16 %v2321
    %v2361 = vunpack.c.l.b16 %v2322
    %v2362 = vunpack.c.l.b16 %v2323
    %v2363 = vunpack.c.l.b16 %v2324
    %v2364 = vunpack.c.l.b16 %v2325
    %v2365 = vunpack.c.l.b16 %v2326
    %v2366 = vunpack.c.l.b16 %v2327
    %v2367 = vunpack.c.l.b16 %v2328
    %v2368 = vunpack.c.l.b16 %v2329
    %v2369 = vpack.c.b16 %v2354, %v2353
    %v2370 = vpack.c.b16 %v2356, %v2355
    %v2371 = vpack.c.b16 %v2358, %v2357
    %v2372 = vpack.c.b16 %v2360, %v2359
    %v2373 = vpack.c.b16 %v2362, %v2361
    %v2374 = vpack.c.b16 %v2364, %v2363
    %v2375 = vpack.c.b16 %v2366, %v2365
    %v2376 = vpack.c.b16 %v2368, %v2367
    %2385 = vmatprep.subr.bf16.mxu0 0
    %2386 = vmatpush1.bf16.msra.mxu0 %v2369
    %2387 = vmatprep.subr.bf16.mxu0 0
    %2388 = vmatpush1.bf16.msra.mxu0 %v2370
    %2389 = vmatprep.subr.bf16.mxu0 0
    %2390 = vmatpush1.bf16.msra.mxu0 %v2371
    %2391 = vmatprep.subr.bf16.mxu0 0
    %2392 = vmatpush1.bf16.msra.mxu0 %v2372
    %2393 = vmatprep.subr.bf16.mxu0 0
    %2394 = vmatpush1.bf16.msra.mxu0 %v2373
    %2395 = vmatprep.subr.bf16.mxu0 0
    %2396 = vmatpush1.bf16.msra.mxu0 %v2374
    %2397 = vmatprep.subr.bf16.mxu0 0
    %2398 = vmatpush1.bf16.msra.mxu0 %v2375
    %2399 = vmatprep.subr.bf16.mxu0 0
    %2400 = vmatpush1.bf16.msra.mxu0 %v2376
    %2401 = vmatprep.subr.bf16.mxu0 0
    %2402 = vmatpush1.bf16.msra.mxu0 0
    %2403 = vmatprep.subr.bf16.mxu0 0
    %2404 = vmatpush1.bf16.msra.mxu0 0
    %2405 = vmatprep.subr.bf16.mxu0 0
    %2406 = vmatpush1.bf16.msra.mxu0 0
    %2407 = vmatprep.subr.bf16.mxu0 0
    %2408 = vmatpush1.bf16.msra.mxu0 0
    %2409 = vmatprep.subr.bf16.mxu0 0
    %2410 = vmatpush1.bf16.msra.mxu0 0
    %2411 = vmatprep.subr.bf16.mxu0 0
    %2412 = vmatpush1.bf16.msra.mxu0 0
    %2413 = vmatprep.subr.bf16.mxu0 0
    %2414 = vmatpush1.bf16.msra.mxu0 0
    %2415 = vmatprep.subr.bf16.mxu0 0
    %2416 = vmatpush1.bf16.msra.mxu0 0
    %2417 = vmatprep.mubr.bf16.mxu0 0
    %2418 = vmatmul.mubr.bf16.gmra.mrb[0].mxu0 %v2313
    %v2419 = vpop.f32.mrb[0].mxu0
    %v2420 = vadd.f32 %v2335, %v2419
    %v2421 = vpop.f32.mrb[0].mxu0
    %v2422 = vpop.f32.mrb[0].mxu0
    %v2423 = vpop.f32.mrb[0].mxu0
    %2424 = vdwg.mxu0
    %vm2425 = vcmask 64512
    %2426 = vst.msk [vmem:[#allocation8] sm:$0xff] %vm2425, %v2420
    // Predicated region
    $region50: #{neural_network_v2_forward.1} parent=1 // pred_check
      _
    $region51: #{neural_network_v2_forward.1} parent=1 // pred_check_branch
      %2428 = sbr.rel (0) target = $region53
    $region52: #{neural_network_v2_forward.1} parent=1 // pred_region
      %s2430 = ssub.s32 128, 128
      %2431 = vsyncadd [#allocation4], %s2430
      %s2433 = sshll.u32 [#allocation8], 4
      %s2434 = int_to_ptr.vmem [resolvable:$true] %s2433
      %2436 = dma.vmem_to_hbm [thread:$0]  %s2434, 128, %s9, [#allocation4]
    $region53: #{neural_network_v2_forward.1} parent=1 // pred_fallthru
      _
    // Predicated region
    $region54: #{neural_network_v2_forward.1} parent=1 // pred_check
      _
    $region55: #{neural_network_v2_forward.1} parent=1 // pred_check_branch
      %2438 = sbr.rel (0) target = $region57
    $region56: #{neural_network_v2_forward.1} parent=1 // pred_region
      %2439 = dma.done [#allocation4], 128
    $region57: #{neural_network_v2_forward.1} parent=1 // pred_fallthru
      _
    %2440 = vsyncpa [#allocation3], 1
    %2441 = vsyncpa [#allocation6], 1
    %2442 = vsyncpa [#allocation4], 1

</llo_original>
